<compile_context>
chip_gen: v7x
topology: tpu7x:2x2x1
jax: 0.10.0
libtpu: 0.0.40
codegen_flags: <defaults>
</compile_context>

<pallas_src>
import functools

import jax
import jax.numpy as jnp
from jax.experimental import pallas as pl
from jax.experimental.pallas import tpu as pltpu


def _fused_ffn_kernel(xp_ref, w1_ref, b1_ref, w2_ref, b2_ref, o_ref, hbuf_ref,
                      *, K, T, Tt):
    """One (batch, time-tile) grid step of the fused conv-ReLU-conv FFN.

    xp_ref  : (Tpad, Cin)   zero-padded input slab for this batch element
                            (Tpad = nT*Tt + 2*(K-1); padded row j == input row
                             j-(K-1)); resident across time tiles.
    w1_ref  : (K, Cin, H)   tap-major conv1 weight (resident, single-buffered)
    b1_ref  : (1, H)        f32
    w2_ref  : (K, H, Cout)  tap-major conv2 weight (resident, single-buffered)
    b2_ref  : (1, Cout)     f32
    o_ref   : (Tt, Cout)    output tile
    hbuf_ref: (Th, H)       hidden activation (tile + K-1 halo), compute dtype
    """
    ti = pl.program_id(1)
    pad = (K - 1) // 2
    H = hbuf_ref.shape[1]
    Cout = o_ref.shape[1]
    Th = Tt + K - 1                       # hidden rows this tile needs

    t0 = ti * Tt
    if Tt % 8 == 0:
        t0 = pl.multiple_of(t0, 8)

    # ---- conv1 + bias + ReLU (f32 epilogue) --------------------------------
    # Hidden row g = t0 - pad + s (s in [0, Th)) for tap k1 reads padded input
    # row t0 + k1 + s, which is statically in-bounds for every tile.
    acc1 = jnp.zeros((Th, H), jnp.float32)
    for k1 in range(K):                   # K is a small static constant
        acc1 = acc1 + jnp.dot(
            xp_ref[pl.ds(t0 + k1, Th), :], w1_ref[k1],
            preferred_element_type=jnp.float32)
    acc1 = jnp.maximum(acc1 + b1_ref[...].astype(jnp.float32), 0.0)
    # TODO(synk): dropout is identity here (eval-mode semantics).
    hbuf_ref[...] = acc1.astype(hbuf_ref.dtype)

    # Hidden rows outside [0, T) are conv2's zero padding.  Only the tiles that
    # touch a sequence edge need the mask -> gate it so interior tiles pay
    # nothing (pure VPU filler otherwise).
    @pl.when(jnp.logical_or(t0 < pad, t0 + Tt + pad > T))
    def _():
        g = (t0 - pad) + jax.lax.broadcasted_iota(jnp.int32, (Th, 1), 0)
        keep = jnp.logical_and(g >= 0, g < T)
        hbuf_ref[...] = jnp.where(keep, hbuf_ref[...], 0).astype(hbuf_ref.dtype)

    # ---- conv2 + bias, directly on the in-VMEM hidden activation ------------
    acc2 = jnp.zeros((Tt, Cout), jnp.float32)
    for k2 in range(K):
        acc2 = acc2 + jnp.dot(
            hbuf_ref[k2:k2 + Tt, :], w2_ref[k2],
            preferred_element_type=jnp.float32)
    acc2 = acc2 + b2_ref[...].astype(jnp.float32)
    o_ref[...] = acc2.astype(o_ref.dtype)


def prepare_params(w1, b1, w2, b2, *, dtype=None):
    """One-time (model-load) conversion of torch-layout Conv1d params.

    w: (Cout, Cin, K) -> tap-major (K, Cin, Cout); b: (Cout,) -> (1, Cout) f32.
    `dtype=jnp.bfloat16` casts only the weights (the matmul inputs) for ~2x MXU
    throughput; biases stay f32 because the epilogue is computed in f32.
    """
    if dtype is not None:
        w1, w2 = w1.astype(dtype), w2.astype(dtype)
    b1 = b1.astype(jnp.float32).reshape(1, -1)
    b2 = b2.astype(jnp.float32).reshape(1, -1)
    return (jnp.transpose(w1, (2, 1, 0)), b1,
            jnp.transpose(w2, (2, 1, 0)), b2)


def _vmem_capacity_bytes():
    try:
        info = pltpu.get_tpu_info()
        return int(getattr(info, "vmem_capacity_bytes", 64 * 2**20))
    except Exception:          # no TPU info available -> be conservative (v7x)
        return 64 * 2**20


def multi_layered_conv1d(x, w1t, b1, w2t, b2, *, time_tile=None):
    """Fused forward pass of MultiLayeredConv1d (eval mode).

    x: (B, T, Cin); w1t: (K, Cin, H); b1: (1, H); w2t: (K, H, Cout); b2: (1, Cout)
    Returns (B, T, Cout) in x.dtype, matching torch Conv1d 'same' padding:
        w_2(dropout(relu(w_1(x^T)))^T ^T)^T
    The compute dtype is w1t.dtype (pass bf16 weights for the fast path); all
    matmuls accumulate in f32.
    """
    B, T, Cin = x.shape
    K, Cin_w, H = w1t.shape
    K2, H2, Cout = w2t.shape
    assert Cin_w == Cin and K2 == K and H2 == H
    # torch.nn.Conv1d(padding=(K-1)//2) only preserves length T for odd K.
    assert K % 2 == 1, "only odd kernel_size is supported (matches 'same' conv)"

    cdtype = w1t.dtype                      # compute dtype (bf16 fast path)
    out_dtype = x.dtype

    # ---- generation-aware tile size ----------------------------------------
    vmem_cap = _vmem_capacity_bytes()
    max_tile = 1024 if vmem_cap >= 100 * 2**20 else 512   # v5e/v6e vs v7x
    if time_tile is None:
        Tt = T if T <= max_tile else max_tile
    else:
        Tt = min(int(time_tile), T)
    assert Tt == T or Tt % 8 == 0, "time tile must be a multiple of 8 (or == T)"
    nT = pl.cdiv(T, Tt)
    Th = Tt + K - 1
    Tpad = nT * Tt + 2 * (K - 1)

    # Zero-pad x along time (conv halo + tile remainder) fused with the cast to
    # the compute dtype -- one cheap XLA pass; makes every per-tile read
    # statically in-bounds and keeps all time tiles independent.
    xp = jnp.pad(x.astype(cdtype), ((0, 0), (K - 1, Tpad - (K - 1) - T), (0, 0)))

    # ---- VMEM budget (incl. f32 accumulator temporaries) --------------------
    csz = jnp.dtype(cdtype).itemsize
    osz = jnp.dtype(out_dtype).itemsize
    est = (2 * Tpad * Cin * csz                       # x slab, double-buffered
           + 2 * Tt * Cout * osz                      # output tile pipeline
           + 2 * (K * Cin * H + K * H * Cout) * csz   # weights (worst case 2x)
           + 2 * (H + Cout) * 4                       # biases
           + Th * H * csz                             # hbuf scratch
           + Th * H * 4 + Tt * Cout * 4               # f32 acc1 / acc2 temps
           + 2 * Th * Cin * csz)                      # live per-tap x windows
    vmem_limit = max(32 * 2**20, int(1.4 * est))
    vmem_limit = max(min(vmem_limit, int(0.85 * vmem_cap)), 16 * 2**20)

    kernel = functools.partial(_fused_ffn_kernel, K=K, T=T, Tt=Tt)

    def build(single_buffer_weights):
        # Weights/biases have constant index maps: single-buffer them to
        # reclaim VMEM (most valuable under v7x's 64 MiB).
        wkw = {"pipeline_mode": pl.Buffered(1)} if single_buffer_weights else {}
        grid_spec = pltpu.PrefetchScalarGridSpec(
            num_scalar_prefetch=0,
            grid=(B, nT),
            in_specs=[
                pl.BlockSpec((None, Tpad, Cin), lambda b, t: (b, 0, 0)),
                pl.BlockSpec((K, Cin, H), lambda b, t: (0, 0, 0), **wkw),
                pl.BlockSpec((1, H), lambda b, t: (0, 0), **wkw),
                pl.BlockSpec((K, H, Cout), lambda b, t: (0, 0, 0), **wkw),
                pl.BlockSpec((1, Cout), lambda b, t: (0, 0), **wkw),
            ],
            out_specs=pl.BlockSpec((None, Tt, Cout), lambda b, t: (b, t, 0)),
            scratch_shapes=[pltpu.VMEM((Th, H), cdtype)],
        )
        return pl.pallas_call(
            kernel,
            out_shape=jax.ShapeDtypeStruct((B, T, Cout), out_dtype),
            grid_spec=grid_spec,
            compiler_params=pltpu.CompilerParams(
                # Tiles are independent -> both axes parallel (v7x: time tiles
                # are sharded across the 2 TensorCores even when B is tiny).
                dimension_semantics=("parallel", "parallel"),
                vmem_limit_bytes=vmem_limit,
            ),
        )

    try:
        return build(True)(xp, w1t, b1, w2t, b2)
    except Exception:
        # Older Pallas builds may reject Buffered(1); semantics are identical
        # without it (weights just get the default double buffer).
        return build(False)(xp, w1t, b1, w2t, b2)


def _reference(x, w1, b1, w2, b2):
    """Pure-JAX reference using lax.conv_general_dilated (NCW, like torch)."""
    def conv(inp_btc, w, b):
        K = w.shape[-1]
        pad = (K - 1) // 2
        out = jax.lax.conv_general_dilated(
            jnp.transpose(inp_btc, (0, 2, 1)),   # (B, Cin, T)
            w,                                   # (Cout, Cin, K)
            window_strides=(1,),
            padding=[(pad, pad)],
            dimension_numbers=("NCH", "OIH", "NCH"),
        ) + b[None, :, None]
        return jnp.transpose(out, (0, 2, 1))     # (B, T, Cout)
    h = jax.nn.relu(conv(x, w1, b1))
    return conv(h, w2, b2)


if __name__ == "__main__":
    # Small shapes consistent with the module's forward: x is (B, T, in_chans).
    B = 2
    in_chans, hidden_chans, kernel_size = 8, 32, 3
    dropout_rate = 0.1  # unused in eval mode

    key = jax.random.PRNGKey(0)
    kx, kw1, kb1, kw2, kb2, kx2, kx3 = jax.random.split(key, 7)

    # Deterministic init matching torch.nn.Conv1d default: U(-s, s), s=1/sqrt(Cin*K)
    s1 = 1.0 / (in_chans * kernel_size) ** 0.5
    w1 = jax.random.uniform(kw1, (hidden_chans, in_chans, kernel_size),
                            minval=-s1, maxval=s1, dtype=jnp.float32)
    b1 = jax.random.uniform(kb1, (hidden_chans,), minval=-s1, maxval=s1,
                            dtype=jnp.float32)
    s2 = 1.0 / (hidden_chans * kernel_size) ** 0.5
    w2 = jax.random.uniform(kw2, (in_chans, hidden_chans, kernel_size),
                            minval=-s2, maxval=s2, dtype=jnp.float32)
    b2 = jax.random.uniform(kb2, (in_chans,), minval=-s2, maxval=s2,
                            dtype=jnp.float32)

    # One-time param prep (tap-major weights): f32 path and bf16 fast path.
    w1t, b1r, w2t, b2r = prepare_params(w1, b1, w2, b2)
    w1t_bf, b1r_bf, w2t_bf, b2r_bf = prepare_params(w1, b1, w2, b2,
                                                    dtype=jnp.bfloat16)

    # Moderate tolerance for the f32-weight tests: the MXU's default matmul
    # precision may use bf16 passes; structural/padding bugs would be >> 2e-2.
    TOL = 2e-2

    # Test 1: single time tile (Tt == T), f32 params.
    T1 = 16
    x1 = jax.random.normal(kx, (B, T1, in_chans), dtype=jnp.float32)
    y1 = jax.block_until_ready(multi_layered_conv1d(x1, w1t, b1r, w2t, b2r))
    y1_ref = jax.block_until_ready(_reference(x1, w1, b1, w2, b2))
    assert y1.shape == (B, T1, in_chans), y1.shape
    assert jnp.allclose(y1, y1_ref, atol=TOL, rtol=TOL), float(
        jnp.max(jnp.abs(y1 - y1_ref)))

    # Test 2: multiple time tiles (exercises halo'd reads + edge masking).
    T2 = 48
    x2 = jax.random.normal(kx2, (B, T2, in_chans), dtype=jnp.float32)
    y2 = jax.block_until_ready(
        multi_layered_conv1d(x2, w1t, b1r, w2t, b2r, time_tile=16))
    y2_ref = jax.block_until_ready(_reference(x2, w1, b1, w2, b2))
    assert y2.shape == (B, T2, in_chans), y2.shape
    assert jnp.allclose(y2, y2_ref, atol=TOL, rtol=TOL), float(
        jnp.max(jnp.abs(y2 - y2_ref)))

    # Test 3: T not divisible by the time tile (partial last output block).
    T3 = 44
    x3 = jax.random.normal(kx3, (B, T3, in_chans), dtype=jnp.float32)
    y3 = jax.block_until_ready(
        multi_layered_conv1d(x3, w1t, b1r, w2t, b2r, time_tile=16))
    y3_ref = jax.block_until_ready(_reference(x3, w1, b1, w2, b2))
    assert y3.shape == (B, T3, in_chans), y3.shape
    assert jnp.allclose(y3, y3_ref, atol=TOL, rtol=TOL), float(
        jnp.max(jnp.abs(y3 - y3_ref)))

    # Test 4: bf16 fast path (bf16 MXU inputs, f32 accumulate/epilogue).
    y4 = jax.block_until_ready(
        multi_layered_conv1d(x2, w1t_bf, b1r_bf, w2t_bf, b2r_bf, time_tile=16))
    assert y4.shape == (B, T2, in_chans) and y4.dtype == x2.dtype
    assert jnp.allclose(y4, y2_ref, atol=1e-1, rtol=1e-1), float(
        jnp.max(jnp.abs(y4 - y2_ref)))

    print("KERNEL_OK")
</pallas_src>

<mosaic_0001>
module attributes {stable_mosaic.version = 11 : i64} {
  func.func @_fused_ffn_kernel(%arg0: i32, %arg1: i32, %arg2: memref<1x20x8xf32, #tpu.memory_space<vmem>>, %arg3: memref<3x8x32xf32, #tpu.memory_space<vmem>>, %arg4: memref<1x32xf32, #tpu.memory_space<vmem>>, %arg5: memref<3x32x8xf32, #tpu.memory_space<vmem>>, %arg6: memref<1x8xf32, #tpu.memory_space<vmem>>, %arg7: memref<1x16x8xf32, #tpu.memory_space<vmem>>, %arg8: memref<18x32xf32, #tpu.memory_space<vmem>>) attributes {dimension_semantics = [#tpu.dimension_semantics<parallel>, #tpu.dimension_semantics<parallel>], iteration_bounds = array<i64: 2, 1>, scalar_prefetch = 0 : i64, scratch_operands = 1 : i64, tpu.core_type = #tpu.core_type<tc>, window_params = [{transform_indices = @transform_0, window_bounds = array<i64: 1, 20, 8>}, {pipeline_mode = #tpu.pipeline_mode<synchronous>, transform_indices = @transform_1, window_bounds = array<i64: 3, 8, 32>}, {pipeline_mode = #tpu.pipeline_mode<synchronous>, transform_indices = @transform_2, window_bounds = array<i64: 1, 32>}, {pipeline_mode = #tpu.pipeline_mode<synchronous>, transform_indices = @transform_3, window_bounds = array<i64: 3, 32, 8>}, {pipeline_mode = #tpu.pipeline_mode<synchronous>, transform_indices = @transform_4, window_bounds = array<i64: 1, 8>}, {transform_indices = @transform_5, window_bounds = array<i64: 1, 16, 8>}]} {
    %c16_i32 = arith.constant 16 : i32
    %0 = arith.muli %arg1, %c16_i32 : i32
    %1 = tpu.assume_multiple %0, 8 : i32
    %cst = arith.constant 0.000000e+00 : f32
    %2 = vector.broadcast %cst : f32 to vector<18x32xf32>
    %c0_i32 = arith.constant 0 : i32
    %3 = arith.addi %1, %c0_i32 : i32
    %c0 = arith.constant 0 : index
    %4 = arith.index_cast %3 : i32 to index
    %c0_0 = arith.constant 0 : index
    %5 = vector.load %arg2[%c0, %4, %c0_0] : memref<1x20x8xf32, #tpu.memory_space<vmem>>, vector<1x18x8xf32>
    %6 = vector.shape_cast %5 : vector<1x18x8xf32> to vector<18x8xf32>
    %c0_1 = arith.constant 0 : index
    %c0_2 = arith.constant 0 : index
    %c0_3 = arith.constant 0 : index
    %7 = vector.load %arg3[%c0_1, %c0_2, %c0_3] : memref<3x8x32xf32, #tpu.memory_space<vmem>>, vector<1x8x32xf32>
    %8 = vector.shape_cast %7 : vector<1x8x32xf32> to vector<8x32xf32>
    %cst_4 = arith.constant dense<0.000000e+00> : vector<18x32xf32>
    %9 = tpu.matmul %6, %8, %cst_4 {dimension_numbers = #tpu.dot_dimension_numbers<[1], [0], [0], [1], [0, 0, 1, 1], [], []>} : vector<18x8xf32>, vector<8x32xf32>, vector<18x32xf32> -> vector<18x32xf32>
    %10 = arith.addf %2, %9 : vector<18x32xf32>
    %c1_i32 = arith.constant 1 : i32
    %11 = arith.addi %1, %c1_i32 : i32
    %c0_5 = arith.constant 0 : index
    %12 = arith.index_cast %11 : i32 to index
    %c0_6 = arith.constant 0 : index
    %13 = vector.load %arg2[%c0_5, %12, %c0_6] : memref<1x20x8xf32, #tpu.memory_space<vmem>>, vector<1x18x8xf32>
    %14 = vector.shape_cast %13 : vector<1x18x8xf32> to vector<18x8xf32>
    %c1 = arith.constant 1 : index
    %c0_7 = arith.constant 0 : index
    %c0_8 = arith.constant 0 : index
    %15 = vector.load %arg3[%c1, %c0_7, %c0_8] : memref<3x8x32xf32, #tpu.memory_space<vmem>>, vector<1x8x32xf32>
    %16 = vector.shape_cast %15 : vector<1x8x32xf32> to vector<8x32xf32>
    %cst_9 = arith.constant dense<0.000000e+00> : vector<18x32xf32>
    %17 = tpu.matmul %14, %16, %cst_9 {dimension_numbers = #tpu.dot_dimension_numbers<[1], [0], [0], [1], [0, 0, 1, 1], [], []>} : vector<18x8xf32>, vector<8x32xf32>, vector<18x32xf32> -> vector<18x32xf32>
    %18 = arith.addf %10, %17 : vector<18x32xf32>
    %c2_i32 = arith.constant 2 : i32
    %19 = arith.addi %1, %c2_i32 : i32
    %c0_10 = arith.constant 0 : index
    %20 = arith.index_cast %19 : i32 to index
    %c0_11 = arith.constant 0 : index
    %21 = vector.load %arg2[%c0_10, %20, %c0_11] : memref<1x20x8xf32, #tpu.memory_space<vmem>>, vector<1x18x8xf32>
    %22 = vector.shape_cast %21 : vector<1x18x8xf32> to vector<18x8xf32>
    %c2 = arith.constant 2 : index
    %c0_12 = arith.constant 0 : index
    %c0_13 = arith.constant 0 : index
    %23 = vector.load %arg3[%c2, %c0_12, %c0_13] : memref<3x8x32xf32, #tpu.memory_space<vmem>>, vector<1x8x32xf32>
    %24 = vector.shape_cast %23 : vector<1x8x32xf32> to vector<8x32xf32>
    %cst_14 = arith.constant dense<0.000000e+00> : vector<18x32xf32>
    %25 = tpu.matmul %22, %24, %cst_14 {dimension_numbers = #tpu.dot_dimension_numbers<[1], [0], [0], [1], [0, 0, 1, 1], [], []>} : vector<18x8xf32>, vector<8x32xf32>, vector<18x32xf32> -> vector<18x32xf32>
    %26 = arith.addf %18, %25 : vector<18x32xf32>
    %c0_15 = arith.constant 0 : index
    %c0_16 = arith.constant 0 : index
    %27 = vector.load %arg4[%c0_15, %c0_16] : memref<1x32xf32, #tpu.memory_space<vmem>>, vector<1x32xf32>
    %28 = vector.broadcast %27 : vector<1x32xf32> to vector<18x32xf32>
    %29 = arith.addf %26, %28 : vector<18x32xf32>
    %cst_17 = arith.constant 0.000000e+00 : f32
    %30 = vector.broadcast %cst_17 : f32 to vector<18x32xf32>
    %31 = arith.maximumf %29, %30 : vector<18x32xf32>
    %c0_18 = arith.constant 0 : index
    %c0_19 = arith.constant 0 : index
    %32 = vector.load %arg8[%c0_18, %c0_19] : memref<18x32xf32, #tpu.memory_space<vmem>>, vector<18x32xf32>
    tpu.vector_store %arg8[%c0_18, %c0_19], %31 {strides = array<i32>} : memref<18x32xf32, #tpu.memory_space<vmem>>, vector<18x32xf32>,
    %c1_i32_20 = arith.constant 1 : i32
    %33 = arith.cmpi slt, %1, %c1_i32_20 : i32
    %c16_i32_21 = arith.constant 16 : i32
    %34 = arith.addi %1, %c16_i32_21 : i32
    %c1_i32_22 = arith.constant 1 : i32
    %35 = arith.addi %34, %c1_i32_22 : i32
    %c16_i32_23 = arith.constant 16 : i32
    %36 = arith.cmpi sgt, %35, %c16_i32_23 : i32
    %37 = arith.ori %33, %36 : i1
    %38 = arith.extui %37 : i1 to i32
    %c0_i32_24 = arith.constant 0 : i32
    %39 = arith.cmpi ne, %38, %c0_i32_24 : i32
    scf.if %39 {
      %c1_i32_49 = arith.constant 1 : i32
      %62 = arith.subi %1, %c1_i32_49 : i32
      %63 = tpu.iota {dimensions = array<i32: 0>} : vector<18x1xi32>
      %64 = vector.broadcast %62 : i32 to vector<18x1xi32>
      %65 = arith.addi %64, %63 : vector<18x1xi32>
      %c0_i32_50 = arith.constant 0 : i32
      %66 = vector.broadcast %c0_i32_50 : i32 to vector<18x1xi32>
      %67 = arith.cmpi sge, %65, %66 : vector<18x1xi32>
      %c16_i32_51 = arith.constant 16 : i32
      %68 = vector.broadcast %c16_i32_51 : i32 to vector<18x1xi32>
      %69 = arith.cmpi slt, %65, %68 : vector<18x1xi32>
      %70 = arith.andi %67, %69 : vector<18x1xi1>
      %c0_52 = arith.constant 0 : index
      %c0_53 = arith.constant 0 : index
      %71 = vector.load %arg8[%c0_52, %c0_53] : memref<18x32xf32, #tpu.memory_space<vmem>>, vector<18x32xf32>
      %c0_i32_54 = arith.constant 0 : i32
      %72 = arith.sitofp %c0_i32_54 : i32 to f32
      %73 = vector.shape_cast %70 : vector<18x1xi1> to vector<18x1xi1>
      %74 = vector.broadcast %73 : vector<18x1xi1> to vector<18x32xi1>
      %75 = vector.broadcast %72 : f32 to vector<18x32xf32>
      %76 = arith.select %74, %71, %75 : vector<18x32xi1>, vector<18x32xf32>
      %c0_55 = arith.constant 0 : index
      %c0_56 = arith.constant 0 : index
      %77 = vector.load %arg8[%c0_55, %c0_56] : memref<18x32xf32, #tpu.memory_space<vmem>>, vector<18x32xf32>
      tpu.vector_store %arg8[%c0_55, %c0_56], %76 {strides = array<i32>} : memref<18x32xf32, #tpu.memory_space<vmem>>, vector<18x32xf32>,
    } else {
    }
    %cst_25 = arith.constant 0.000000e+00 : f32
    %40 = vector.broadcast %cst_25 : f32 to vector<16x8xf32>
    %c0_26 = arith.constant 0 : index
    %c0_27 = arith.constant 0 : index
    %41 = vector.load %arg8[%c0_26, %c0_27] : memref<18x32xf32, #tpu.memory_space<vmem>>, vector<16x32xf32>
    %c0_28 = arith.constant 0 : index
    %c0_29 = arith.constant 0 : index
    %c0_30 = arith.constant 0 : index
    %42 = vector.load %arg5[%c0_28, %c0_29, %c0_30] : memref<3x32x8xf32, #tpu.memory_space<vmem>>, vector<1x32x8xf32>
    %43 = vector.shape_cast %42 : vector<1x32x8xf32> to vector<32x8xf32>
    %cst_31 = arith.constant dense<0.000000e+00> : vector<16x8xf32>
    %44 = tpu.matmul %41, %43, %cst_31 {dimension_numbers = #tpu.dot_dimension_numbers<[1], [0], [0], [1], [0, 0, 1, 1], [], []>} : vector<16x32xf32>, vector<32x8xf32>, vector<16x8xf32> -> vector<16x8xf32>
    %45 = arith.addf %40, %44 : vector<16x8xf32>
    %c1_32 = arith.constant 1 : index
    %c0_33 = arith.constant 0 : index
    %46 = vector.load %arg8[%c1_32, %c0_33] : memref<18x32xf32, #tpu.memory_space<vmem>>, vector<16x32xf32>
    %c1_34 = arith.constant 1 : index
    %c0_35 = arith.constant 0 : index
    %c0_36 = arith.constant 0 : index
    %47 = vector.load %arg5[%c1_34, %c0_35, %c0_36] : memref<3x32x8xf32, #tpu.memory_space<vmem>>, vector<1x32x8xf32>
    %48 = vector.shape_cast %47 : vector<1x32x8xf32> to vector<32x8xf32>
    %cst_37 = arith.constant dense<0.000000e+00> : vector<16x8xf32>
    %49 = tpu.matmul %46, %48, %cst_37 {dimension_numbers = #tpu.dot_dimension_numbers<[1], [0], [0], [1], [0, 0, 1, 1], [], []>} : vector<16x32xf32>, vector<32x8xf32>, vector<16x8xf32> -> vector<16x8xf32>
    %50 = arith.addf %45, %49 : vector<16x8xf32>
    %c2_38 = arith.constant 2 : index
    %c0_39 = arith.constant 0 : index
    %51 = vector.load %arg8[%c2_38, %c0_39] : memref<18x32xf32, #tpu.memory_space<vmem>>, vector<16x32xf32>
    %c2_40 = arith.constant 2 : index
    %c0_41 = arith.constant 0 : index
    %c0_42 = arith.constant 0 : index
    %52 = vector.load %arg5[%c2_40, %c0_41, %c0_42] : memref<3x32x8xf32, #tpu.memory_space<vmem>>, vector<1x32x8xf32>
    %53 = vector.shape_cast %52 : vector<1x32x8xf32> to vector<32x8xf32>
    %cst_43 = arith.constant dense<0.000000e+00> : vector<16x8xf32>
    %54 = tpu.matmul %51, %53, %cst_43 {dimension_numbers = #tpu.dot_dimension_numbers<[1], [0], [0], [1], [0, 0, 1, 1], [], []>} : vector<16x32xf32>, vector<32x8xf32>, vector<16x8xf32> -> vector<16x8xf32>
    %55 = arith.addf %50, %54 : vector<16x8xf32>
    %c0_44 = arith.constant 0 : index
    %c0_45 = arith.constant 0 : index
    %56 = vector.load %arg6[%c0_44, %c0_45] : memref<1x8xf32, #tpu.memory_space<vmem>>, vector<1x8xf32>
    %57 = vector.broadcast %56 : vector<1x8xf32> to vector<16x8xf32>
    %58 = arith.addf %55, %57 : vector<16x8xf32>
    %c0_46 = arith.constant 0 : index
    %c0_47 = arith.constant 0 : index
    %c0_48 = arith.constant 0 : index
    %59 = vector.load %arg7[%c0_46, %c0_47, %c0_48] : memref<1x16x8xf32, #tpu.memory_space<vmem>>, vector<1x16x8xf32>
    %60 = vector.shape_cast %59 : vector<1x16x8xf32> to vector<16x8xf32>
    %61 = vector.shape_cast %58 : vector<16x8xf32> to vector<1x16x8xf32>
    tpu.vector_store %arg7[%c0_46, %c0_47, %c0_48], %61 {strides = array<i32>} : memref<1x16x8xf32, #tpu.memory_space<vmem>>, vector<1x16x8xf32>,
    return
  }
  func.func @transform_0(%arg0: i32, %arg1: i32) -> (i32, i32, i32) {
    %c0_i32 = arith.constant 0 : i32
    %c0_i32_0 = arith.constant 0 : i32
    %c0_i32_1 = arith.constant 0 : i32
    return %arg0, %c0_i32, %c0_i32_0 : i32, i32, i32
  }
  func.func @transform_1(%arg0: i32, %arg1: i32) -> (i32, i32, i32) {
    %c0_i32 = arith.constant 0 : i32
    %c0_i32_0 = arith.constant 0 : i32
    %c0_i32_1 = arith.constant 0 : i32
    %c0_i32_2 = arith.constant 0 : i32
    return %c0_i32, %c0_i32_0, %c0_i32_1 : i32, i32, i32
  }
  func.func @transform_2(%arg0: i32, %arg1: i32) -> (i32, i32) {
    %c0_i32 = arith.constant 0 : i32
    %c0_i32_0 = arith.constant 0 : i32
    %c0_i32_1 = arith.constant 0 : i32
    return %c0_i32, %c0_i32_0 : i32, i32
  }
  func.func @transform_3(%arg0: i32, %arg1: i32) -> (i32, i32, i32) {
    %c0_i32 = arith.constant 0 : i32
    %c0_i32_0 = arith.constant 0 : i32
    %c0_i32_1 = arith.constant 0 : i32
    %c0_i32_2 = arith.constant 0 : i32
    return %c0_i32, %c0_i32_0, %c0_i32_1 : i32, i32, i32
  }
  func.func @transform_4(%arg0: i32, %arg1: i32) -> (i32, i32) {
    %c0_i32 = arith.constant 0 : i32
    %c0_i32_0 = arith.constant 0 : i32
    %c0_i32_1 = arith.constant 0 : i32
    return %c0_i32, %c0_i32_0 : i32, i32
  }
  func.func @transform_5(%arg0: i32, %arg1: i32) -> (i32, i32, i32) {
    %c0_i32 = arith.constant 0 : i32
    %c0_i32_0 = arith.constant 0 : i32
    return %arg0, %arg1, %c0_i32 : i32, i32, i32
  }
}

module attributes {stable_mosaic.version = 11 : i64} {
  func.func @_fused_ffn_kernel(%arg0: i32, %arg1: i32, %arg2: memref<1x20x8xf32, #tpu.memory_space<vmem>>, %arg3: memref<3x8x32xf32, #tpu.memory_space<vmem>>, %arg4: memref<1x32xf32, #tpu.memory_space<vmem>>, %arg5: memref<3x32x8xf32, #tpu.memory_space<vmem>>, %arg6: memref<1x8xf32, #tpu.memory_space<vmem>>, %arg7: memref<1x16x8xf32, #tpu.memory_space<vmem>>, %arg8: memref<18x32xf32, #tpu.memory_space<vmem>>) attributes {dimension_semantics = [#tpu.dimension_semantics<parallel>, #tpu.dimension_semantics<parallel>], iteration_bounds = array<i64: 2, 1>, scalar_prefetch = 0 : i64, scratch_operands = 1 : i64, tpu.core_type = #tpu.core_type<tc>, window_params = [{transform_indices = @transform_0, window_bounds = array<i64: 1, 20, 8>}, {pipeline_mode = #tpu.pipeline_mode<synchronous>, transform_indices = @transform_1, window_bounds = array<i64: 3, 8, 32>}, {pipeline_mode = #tpu.pipeline_mode<synchronous>, transform_indices = @transform_2, window_bounds = array<i64: 1, 32>}, {pipeline_mode = #tpu.pipeline_mode<synchronous>, transform_indices = @transform_3, window_bounds = array<i64: 3, 32, 8>}, {pipeline_mode = #tpu.pipeline_mode<synchronous>, transform_indices = @transform_4, window_bounds = array<i64: 1, 8>}, {transform_indices = @transform_5, window_bounds = array<i64: 1, 16, 8>}]} {
    %c16_i32 = arith.constant 16 : i32
    %0 = arith.muli %arg1, %c16_i32 : i32
    %1 = tpu.assume_multiple %0, 8 : i32
    %cst = arith.constant 0.000000e+00 : f32
    %2 = vector.broadcast %cst : f32 to vector<18x32xf32>
    %c0_i32 = arith.constant 0 : i32
    %3 = arith.addi %1, %c0_i32 : i32
    %c0 = arith.constant 0 : index
    %4 = arith.index_cast %3 : i32 to index
    %c0_0 = arith.constant 0 : index
    %5 = vector.load %arg2[%c0, %4, %c0_0] : memref<1x20x8xf32, #tpu.memory_space<vmem>>, vector<1x18x8xf32>
    %6 = vector.shape_cast %5 : vector<1x18x8xf32> to vector<18x8xf32>
    %c0_1 = arith.constant 0 : index
    %c0_2 = arith.constant 0 : index
    %c0_3 = arith.constant 0 : index
    %7 = vector.load %arg3[%c0_1, %c0_2, %c0_3] : memref<3x8x32xf32, #tpu.memory_space<vmem>>, vector<1x8x32xf32>
    %8 = vector.shape_cast %7 : vector<1x8x32xf32> to vector<8x32xf32>
    %cst_4 = arith.constant dense<0.000000e+00> : vector<18x32xf32>
    %9 = tpu.matmul %6, %8, %cst_4 {dimension_numbers = #tpu.dot_dimension_numbers<[1], [0], [0], [1], [0, 0, 1, 1], [], []>} : vector<18x8xf32>, vector<8x32xf32>, vector<18x32xf32> -> vector<18x32xf32>
    %10 = arith.addf %2, %9 : vector<18x32xf32>
    %c1_i32 = arith.constant 1 : i32
    %11 = arith.addi %1, %c1_i32 : i32
    %c0_5 = arith.constant 0 : index
    %12 = arith.index_cast %11 : i32 to index
    %c0_6 = arith.constant 0 : index
    %13 = vector.load %arg2[%c0_5, %12, %c0_6] : memref<1x20x8xf32, #tpu.memory_space<vmem>>, vector<1x18x8xf32>
    %14 = vector.shape_cast %13 : vector<1x18x8xf32> to vector<18x8xf32>
    %c1 = arith.constant 1 : index
    %c0_7 = arith.constant 0 : index
    %c0_8 = arith.constant 0 : index
    %15 = vector.load %arg3[%c1, %c0_7, %c0_8] : memref<3x8x32xf32, #tpu.memory_space<vmem>>, vector<1x8x32xf32>
    %16 = vector.shape_cast %15 : vector<1x8x32xf32> to vector<8x32xf32>
    %cst_9 = arith.constant dense<0.000000e+00> : vector<18x32xf32>
    %17 = tpu.matmul %14, %16, %cst_9 {dimension_numbers = #tpu.dot_dimension_numbers<[1], [0], [0], [1], [0, 0, 1, 1], [], []>} : vector<18x8xf32>, vector<8x32xf32>, vector<18x32xf32> -> vector<18x32xf32>
    %18 = arith.addf %10, %17 : vector<18x32xf32>
    %c2_i32 = arith.constant 2 : i32
    %19 = arith.addi %1, %c2_i32 : i32
    %c0_10 = arith.constant 0 : index
    %20 = arith.index_cast %19 : i32 to index
    %c0_11 = arith.constant 0 : index
    %21 = vector.load %arg2[%c0_10, %20, %c0_11] : memref<1x20x8xf32, #tpu.memory_space<vmem>>, vector<1x18x8xf32>
    %22 = vector.shape_cast %21 : vector<1x18x8xf32> to vector<18x8xf32>
    %c2 = arith.constant 2 : index
    %c0_12 = arith.constant 0 : index
    %c0_13 = arith.constant 0 : index
    %23 = vector.load %arg3[%c2, %c0_12, %c0_13] : memref<3x8x32xf32, #tpu.memory_space<vmem>>, vector<1x8x32xf32>
    %24 = vector.shape_cast %23 : vector<1x8x32xf32> to vector<8x32xf32>
    %cst_14 = arith.constant dense<0.000000e+00> : vector<18x32xf32>
    %25 = tpu.matmul %22, %24, %cst_14 {dimension_numbers = #tpu.dot_dimension_numbers<[1], [0], [0], [1], [0, 0, 1, 1], [], []>} : vector<18x8xf32>, vector<8x32xf32>, vector<18x32xf32> -> vector<18x32xf32>
    %26 = arith.addf %18, %25 : vector<18x32xf32>
    %c0_15 = arith.constant 0 : index
    %c0_16 = arith.constant 0 : index
    %27 = vector.load %arg4[%c0_15, %c0_16] : memref<1x32xf32, #tpu.memory_space<vmem>>, vector<1x32xf32>
    %28 = vector.broadcast %27 : vector<1x32xf32> to vector<18x32xf32>
    %29 = arith.addf %26, %28 : vector<18x32xf32>
    %cst_17 = arith.constant 0.000000e+00 : f32
    %30 = vector.broadcast %cst_17 : f32 to vector<18x32xf32>
    %31 = arith.maximumf %29, %30 : vector<18x32xf32>
    %c0_18 = arith.constant 0 : index
    %c0_19 = arith.constant 0 : index
    %32 = vector.load %arg8[%c0_18, %c0_19] : memref<18x32xf32, #tpu.memory_space<vmem>>, vector<18x32xf32>
    tpu.vector_store %arg8[%c0_18, %c0_19], %31 {strides = array<i32>} : memref<18x32xf32, #tpu.memory_space<vmem>>, vector<18x32xf32>,
    %c1_i32_20 = arith.constant 1 : i32
    %33 = arith.cmpi slt, %1, %c1_i32_20 : i32
    %c16_i32_21 = arith.constant 16 : i32
    %34 = arith.addi %1, %c16_i32_21 : i32
    %c1_i32_22 = arith.constant 1 : i32
    %35 = arith.addi %34, %c1_i32_22 : i32
    %c16_i32_23 = arith.constant 16 : i32
    %36 = arith.cmpi sgt, %35, %c16_i32_23 : i32
    %37 = arith.ori %33, %36 : i1
    %38 = arith.extui %37 : i1 to i32
    %c0_i32_24 = arith.constant 0 : i32
    %39 = arith.cmpi ne, %38, %c0_i32_24 : i32
    scf.if %39 {
      %c1_i32_49 = arith.constant 1 : i32
      %62 = arith.subi %1, %c1_i32_49 : i32
      %63 = tpu.iota {dimensions = array<i32: 0>} : vector<18x1xi32>
      %64 = vector.broadcast %62 : i32 to vector<18x1xi32>
      %65 = arith.addi %64, %63 : vector<18x1xi32>
      %c0_i32_50 = arith.constant 0 : i32
      %66 = vector.broadcast %c0_i32_50 : i32 to vector<18x1xi32>
      %67 = arith.cmpi sge, %65, %66 : vector<18x1xi32>
      %c16_i32_51 = arith.constant 16 : i32
      %68 = vector.broadcast %c16_i32_51 : i32 to vector<18x1xi32>
      %69 = arith.cmpi slt, %65, %68 : vector<18x1xi32>
      %70 = arith.andi %67, %69 : vector<18x1xi1>
      %c0_52 = arith.constant 0 : index
      %c0_53 = arith.constant 0 : index
      %71 = vector.load %arg8[%c0_52, %c0_53] : memref<18x32xf32, #tpu.memory_space<vmem>>, vector<18x32xf32>
      %c0_i32_54 = arith.constant 0 : i32
      %72 = arith.sitofp %c0_i32_54 : i32 to f32
      %73 = vector.shape_cast %70 : vector<18x1xi1> to vector<18x1xi1>
      %74 = vector.broadcast %73 : vector<18x1xi1> to vector<18x32xi1>
      %75 = vector.broadcast %72 : f32 to vector<18x32xf32>
      %76 = arith.select %74, %71, %75 : vector<18x32xi1>, vector<18x32xf32>
      %c0_55 = arith.constant 0 : index
      %c0_56 = arith.constant 0 : index
      %77 = vector.load %arg8[%c0_55, %c0_56] : memref<18x32xf32, #tpu.memory_space<vmem>>, vector<18x32xf32>
      tpu.vector_store %arg8[%c0_55, %c0_56], %76 {strides = array<i32>} : memref<18x32xf32, #tpu.memory_space<vmem>>, vector<18x32xf32>,
    } else {
    }
    %cst_25 = arith.constant 0.000000e+00 : f32
    %40 = vector.broadcast %cst_25 : f32 to vector<16x8xf32>
    %c0_26 = arith.constant 0 : index
    %c0_27 = arith.constant 0 : index
    %41 = vector.load %arg8[%c0_26, %c0_27] : memref<18x32xf32, #tpu.memory_space<vmem>>, vector<16x32xf32>
    %c0_28 = arith.constant 0 : index
    %c0_29 = arith.constant 0 : index
    %c0_30 = arith.constant 0 : index
    %42 = vector.load %arg5[%c0_28, %c0_29, %c0_30] : memref<3x32x8xf32, #tpu.memory_space<vmem>>, vector<1x32x8xf32>
    %43 = vector.shape_cast %42 : vector<1x32x8xf32> to vector<32x8xf32>
    %cst_31 = arith.constant dense<0.000000e+00> : vector<16x8xf32>
    %44 = tpu.matmul %41, %43, %cst_31 {dimension_numbers = #tpu.dot_dimension_numbers<[1], [0], [0], [1], [0, 0, 1, 1], [], []>} : vector<16x32xf32>, vector<32x8xf32>, vector<16x8xf32> -> vector<16x8xf32>
    %45 = arith.addf %40, %44 : vector<16x8xf32>
    %c1_32 = arith.constant 1 : index
    %c0_33 = arith.constant 0 : index
    %46 = vector.load %arg8[%c1_32, %c0_33] : memref<18x32xf32, #tpu.memory_space<vmem>>, vector<16x32xf32>
    %c1_34 = arith.constant 1 : index
    %c0_35 = arith.constant 0 : index
    %c0_36 = arith.constant 0 : index
    %47 = vector.load %arg5[%c1_34, %c0_35, %c0_36] : memref<3x32x8xf32, #tpu.memory_space<vmem>>, vector<1x32x8xf32>
    %48 = vector.shape_cast %47 : vector<1x32x8xf32> to vector<32x8xf32>
    %cst_37 = arith.constant dense<0.000000e+00> : vector<16x8xf32>
    %49 = tpu.matmul %46, %48, %cst_37 {dimension_numbers = #tpu.dot_dimension_numbers<[1], [0], [0], [1], [0, 0, 1, 1], [], []>} : vector<16x32xf32>, vector<32x8xf32>, vector<16x8xf32> -> vector<16x8xf32>
    %50 = arith.addf %45, %49 : vector<16x8xf32>
    %c2_38 = arith.constant 2 : index
    %c0_39 = arith.constant 0 : index
    %51 = vector.load %arg8[%c2_38, %c0_39] : memref<18x32xf32, #tpu.memory_space<vmem>>, vector<16x32xf32>
    %c2_40 = arith.constant 2 : index
    %c0_41 = arith.constant 0 : index
    %c0_42 = arith.constant 0 : index
    %52 = vector.load %arg5[%c2_40, %c0_41, %c0_42] : memref<3x32x8xf32, #tpu.memory_space<vmem>>, vector<1x32x8xf32>
    %53 = vector.shape_cast %52 : vector<1x32x8xf32> to vector<32x8xf32>
    %cst_43 = arith.constant dense<0.000000e+00> : vector<16x8xf32>
    %54 = tpu.matmul %51, %53, %cst_43 {dimension_numbers = #tpu.dot_dimension_numbers<[1], [0], [0], [1], [0, 0, 1, 1], [], []>} : vector<16x32xf32>, vector<32x8xf32>, vector<16x8xf32> -> vector<16x8xf32>
    %55 = arith.addf %50, %54 : vector<16x8xf32>
    %c0_44 = arith.constant 0 : index
    %c0_45 = arith.constant 0 : index
    %56 = vector.load %arg6[%c0_44, %c0_45] : memref<1x8xf32, #tpu.memory_space<vmem>>, vector<1x8xf32>
    %57 = vector.broadcast %56 : vector<1x8xf32> to vector<16x8xf32>
    %58 = arith.addf %55, %57 : vector<16x8xf32>
    %c0_46 = arith.constant 0 : index
    %c0_47 = arith.constant 0 : index
    %c0_48 = arith.constant 0 : index
    %59 = vector.load %arg7[%c0_46, %c0_47, %c0_48] : memref<1x16x8xf32, #tpu.memory_space<vmem>>, vector<1x16x8xf32>
    %60 = vector.shape_cast %59 : vector<1x16x8xf32> to vector<16x8xf32>
    %61 = vector.shape_cast %58 : vector<16x8xf32> to vector<1x16x8xf32>
    tpu.vector_store %arg7[%c0_46, %c0_47, %c0_48], %61 {strides = array<i32>} : memref<1x16x8xf32, #tpu.memory_space<vmem>>, vector<1x16x8xf32>,
    return
  }
  func.func @transform_0(%arg0: i32, %arg1: i32) -> (i32, i32, i32) {
    %c0_i32 = arith.constant 0 : i32
    %c0_i32_0 = arith.constant 0 : i32
    %c0_i32_1 = arith.constant 0 : i32
    return %arg0, %c0_i32, %c0_i32_0 : i32, i32, i32
  }
  func.func @transform_1(%arg0: i32, %arg1: i32) -> (i32, i32, i32) {
    %c0_i32 = arith.constant 0 : i32
    %c0_i32_0 = arith.constant 0 : i32
    %c0_i32_1 = arith.constant 0 : i32
    %c0_i32_2 = arith.constant 0 : i32
    return %c0_i32, %c0_i32_0, %c0_i32_1 : i32, i32, i32
  }
  func.func @transform_2(%arg0: i32, %arg1: i32) -> (i32, i32) {
    %c0_i32 = arith.constant 0 : i32
    %c0_i32_0 = arith.constant 0 : i32
    %c0_i32_1 = arith.constant 0 : i32
    return %c0_i32, %c0_i32_0 : i32, i32
  }
  func.func @transform_3(%arg0: i32, %arg1: i32) -> (i32, i32, i32) {
    %c0_i32 = arith.constant 0 : i32
    %c0_i32_0 = arith.constant 0 : i32
    %c0_i32_1 = arith.constant 0 : i32
    %c0_i32_2 = arith.constant 0 : i32
    return %c0_i32, %c0_i32_0, %c0_i32_1 : i32, i32, i32
  }
  func.func @transform_4(%arg0: i32, %arg1: i32) -> (i32, i32) {
    %c0_i32 = arith.constant 0 : i32
    %c0_i32_0 = arith.constant 0 : i32
    %c0_i32_1 = arith.constant 0 : i32
    return %c0_i32, %c0_i32_0 : i32, i32
  }
  func.func @transform_5(%arg0: i32, %arg1: i32) -> (i32, i32, i32) {
    %c0_i32 = arith.constant 0 : i32
    %c0_i32_0 = arith.constant 0 : i32
    return %arg0, %arg1, %c0_i32 : i32, i32, i32
  }
}

</mosaic_0001>

<llo_original>
// kernel: tpu_custom_call.1
$region0: #{tpu_custom_call.1}
  #allocation0 [shape = 'u32[]', space=smem, size = 0x4, offset = 0x4, fixed_abs, tag = 'smem constant byte address 0x4 - core index']
  #allocation1 [shape = 'u32[144,128]{1,0:T(1,128)}', space=vmem, size = 0x12000, scoped, tag = 'internal scratch']
  #allocation2 [shape = 'f32[18,32]{1,0:T(8,128)}', space=vmem, size = 0x3000, scoped, tag = 'scratch operand']
  %s0 = inlined_call_operand.vmem [shape: f32[2,20,8], index: 0, kind: input, shape index: {}]
  %s1 = inlined_call_operand.vmem [shape: f32[3,8,32], index: 1, kind: input, shape index: {}]
  %s2 = inlined_call_operand.vmem [shape: f32[1,32], index: 2, kind: input, shape index: {}]
  %s3 = inlined_call_operand.vmem [shape: f32[3,32,8], index: 3, kind: input, shape index: {}]
  %s4 = inlined_call_operand.vmem [shape: f32[1,8], index: 4, kind: input, shape index: {}]
  %s5 = inlined_call_operand.vmem [shape: f32[2,16,8], index: 5, kind: output, shape index: {}]
  %s6 = sld [smem:[#allocation0]]
  $region57: #{tpu_custom_call.1} parent=0
    _
  %s8 = ssub.s32 1, %s6
  %s9 = scalar_select 0, %s8, %s6
  loop: start=0, step=1, limit=4
  $region2: #{tpu_custom_call.1} parent=0 // loop_pre_header
    _
  $region3: #{tpu_custom_call.1} parent=0 // loop_header
    %s11 = sphi 0, %s15
    %p12 = scmp.ge.s32.totalorder %s11, 4
    %s18 = sphi 0, %s30
    %s19 = sphi 0, %s26
    %s20 = sphi 0, %s18
    %s21 = sphi 0, %s19
    %s22 = sphi 0, %s20
    %s23 = sphi 0, %s21
    %s33 = sphi 0, %s35
    %s36 = sphi 0, %s33
    %s37 = sphi 0, %s36
    %s53 = sphi 0, %s37
    %s57 = sphi 0, %s57
    %s59 = sphi 0, %s57
    %s60 = sphi 0, %s59
    %s74 = sphi 0, %s60
    %s78 = sphi 0, %s78
    %s80 = sphi 0, %s78
    %s81 = sphi 0, %s80
    %s95 = sphi 0, %s81
    %s99 = sphi 0, %s99
    %s101 = sphi 0, %s99
    %s102 = sphi 0, %s101
    %s116 = sphi 0, %s102
    %s120 = sphi 0, %s120
    %s122 = sphi 0, %s120
    %s123 = sphi 0, %s122
    %s137 = sphi 0, %s123
    %s145 = sphi 0, %s147
    %s148 = sphi 0, %s145
    %s149 = sphi 0, %s148
    %s165 = sphi 0, %s149
  $region4: #{tpu_custom_call.1} parent=0 // loop_header_branch
    %14 = sbr.rel (%p12) target = $region8
  $region5: #{tpu_custom_call.1} parent=0 // loop_body
    %s16 = ssub.s32 %s11, 1
    %s17 = ssub.s32 %s11, 2
    %s24 = sadd.s32 1, %s19
    %p25 = scmp.ge.s32.totalorder %s24, 1
    %s26 = scalar_select %p25, 0, %s24
    %s27 = sadd.s32 1, %s18
    %s28 = scalar_select %p25, %s27, %s18
    %p29 = scmp.ge.s32.totalorder %s28, 2
    %s30 = scalar_select %p29, 0, %s28
    %s31 = ssub.s32 %s18, %s30
    %p32 = scmp.eq.s32.totalorder %s31, 0
    %s34 = sadd.s32 %s33, 1
    %s35 = scalar_select %p32, %s33, %s34
    %p38 = pneg %p32
    %p39 = scmp.eq.s32.totalorder %s11, 1
    %p40 = por %p38, %p39
    %p41 = scmp.ne.s32.totalorder %s33, %s36
    %p42 = scmp.eq.s32.totalorder %s11, 0
    %p43 = por %p41, %p42
    %p44 = scmp.ne.s32.totalorder %s33, %s36
    %p45 = scmp.eq.s32.totalorder %s16, 1
    %p46 = por %p44, %p45
    %p47 = scmp.ne.s32.totalorder %s36, %s37
    %p48 = scmp.eq.s32.totalorder %s16, 0
    %p49 = por %p47, %p48
    %p50 = scmp.ne.s32.totalorder %s36, %s37
    %p51 = scmp.eq.s32.totalorder %s17, 1
    %p52 = por %p50, %p51
    %p54 = scmp.ne.s32.totalorder %s37, %s53
    %p55 = scmp.eq.s32.totalorder %s17, 0
    %p56 = por %p54, %p55
    %s58 = sadd.s32 %s57, 1
    %p61 = scmp.eq.s32.totalorder %s11, 1
    %p62 = scmp.ne.s32.totalorder %s57, %s59
    %p63 = scmp.eq.s32.totalorder %s11, 0
    %p64 = por %p62, %p63
    %p65 = scmp.ne.s32.totalorder %s57, %s59
    %p66 = scmp.eq.s32.totalorder %s16, 1
    %p67 = por %p65, %p66
    %p68 = scmp.ne.s32.totalorder %s59, %s60
    %p69 = scmp.eq.s32.totalorder %s16, 0
    %p70 = por %p68, %p69
    %p71 = scmp.ne.s32.totalorder %s59, %s60
    %p72 = scmp.eq.s32.totalorder %s17, 1
    %p73 = por %p71, %p72
    %p75 = scmp.ne.s32.totalorder %s60, %s74
    %p76 = scmp.eq.s32.totalorder %s17, 0
    %p77 = por %p75, %p76
    %s79 = sadd.s32 %s78, 1
    %p82 = scmp.eq.s32.totalorder %s11, 1
    %p83 = scmp.ne.s32.totalorder %s78, %s80
    %p84 = scmp.eq.s32.totalorder %s11, 0
    %p85 = por %p83, %p84
    %p86 = scmp.ne.s32.totalorder %s78, %s80
    %p87 = scmp.eq.s32.totalorder %s16, 1
    %p88 = por %p86, %p87
    %p89 = scmp.ne.s32.totalorder %s80, %s81
    %p90 = scmp.eq.s32.totalorder %s16, 0
    %p91 = por %p89, %p90
    %p92 = scmp.ne.s32.totalorder %s80, %s81
    %p93 = scmp.eq.s32.totalorder %s17, 1
    %p94 = por %p92, %p93
    %p96 = scmp.ne.s32.totalorder %s81, %s95
    %p97 = scmp.eq.s32.totalorder %s17, 0
    %p98 = por %p96, %p97
    %s100 = sadd.s32 %s99, 1
    %p103 = scmp.eq.s32.totalorder %s11, 1
    %p104 = scmp.ne.s32.totalorder %s99, %s101
    %p105 = scmp.eq.s32.totalorder %s11, 0
    %p106 = por %p104, %p105
    %p107 = scmp.ne.s32.totalorder %s99, %s101
    %p108 = scmp.eq.s32.totalorder %s16, 1
    %p109 = por %p107, %p108
    %p110 = scmp.ne.s32.totalorder %s101, %s102
    %p111 = scmp.eq.s32.totalorder %s16, 0
    %p112 = por %p110, %p111
    %p113 = scmp.ne.s32.totalorder %s101, %s102
    %p114 = scmp.eq.s32.totalorder %s17, 1
    %p115 = por %p113, %p114
    %p117 = scmp.ne.s32.totalorder %s102, %s116
    %p118 = scmp.eq.s32.totalorder %s17, 0
    %p119 = por %p117, %p118
    %s121 = sadd.s32 %s120, 1
    %p124 = scmp.eq.s32.totalorder %s11, 1
    %p125 = scmp.ne.s32.totalorder %s120, %s122
    %p126 = scmp.eq.s32.totalorder %s11, 0
    %p127 = por %p125, %p126
    %p128 = scmp.ne.s32.totalorder %s120, %s122
    %p129 = scmp.eq.s32.totalorder %s16, 1
    %p130 = por %p128, %p129
    %p131 = scmp.ne.s32.totalorder %s122, %s123
    %p132 = scmp.eq.s32.totalorder %s16, 0
    %p133 = por %p131, %p132
    %p134 = scmp.ne.s32.totalorder %s122, %s123
    %p135 = scmp.eq.s32.totalorder %s17, 1
    %p136 = por %p134, %p135
    %p138 = scmp.ne.s32.totalorder %s123, %s137
    %p139 = scmp.eq.s32.totalorder %s17, 0
    %p140 = por %p138, %p139
    %s141 = ssub.s32 %s18, %s30
    %s142 = ssub.s32 %s19, %s26
    %s143 = sor.u32 %s141, %s142
    %p144 = scmp.eq.s32.totalorder %s143, 0
    %s146 = sadd.s32 %s145, 1
    %s147 = scalar_select %p144, %s145, %s146
    %p150 = pneg %p144
    %p151 = scmp.eq.s32.totalorder %s11, 1
    %p152 = por %p150, %p151
    %p153 = scmp.ne.s32.totalorder %s145, %s148
    %p154 = scmp.eq.s32.totalorder %s11, 0
    %p155 = por %p153, %p154
    %p156 = scmp.ne.s32.totalorder %s145, %s148
    %p157 = scmp.eq.s32.totalorder %s16, 1
    %p158 = por %p156, %p157
    %p159 = scmp.ne.s32.totalorder %s148, %s149
    %p160 = scmp.eq.s32.totalorder %s16, 0
    %p161 = por %p159, %p160
    %p162 = scmp.ne.s32.totalorder %s148, %s149
    %p163 = scmp.eq.s32.totalorder %s17, 1
    %p164 = por %p162, %p163
    %p166 = scmp.ne.s32.totalorder %s149, %s165
    %p167 = scmp.eq.s32.totalorder %s17, 0
    %p168 = por %p166, %p167
    %p169 = scmp.le.s32.totalorder 1, %s11
    %p170 = scmp.lt.s32.totalorder %s11, 3
    %p171 = pnand %p169, %p170
    %p172 = pneg %p171
    // Predicated region
    $region9: #{tpu_custom_call.1} parent=5 // pred_check
      _
    $region10: #{tpu_custom_call.1} parent=5 // pred_check_branch
      %174 = sbr.rel (%p171) target = $region12
    $region11: #{tpu_custom_call.1} parent=5 // pred_region
      %s175 = ssub.s32 %s11, 1
      // Predicated region
      $region13: #{tpu_custom_call.1} parent=11 // pred_check
        %p176 = pneg %p70
      $region14: #{tpu_custom_call.1} parent=11 // pred_check_branch
        %178 = sbr.rel (%p176) target = $region16
      $region15: #{tpu_custom_call.1} parent=11 // pred_region
        _
      $region16: #{tpu_custom_call.1} parent=11 // pred_fallthru
        _
      // Predicated region
      $region17: #{tpu_custom_call.1} parent=11 // pred_check
        %p179 = pneg %p91
      $region18: #{tpu_custom_call.1} parent=11 // pred_check_branch
        %181 = sbr.rel (%p179) target = $region20
      $region19: #{tpu_custom_call.1} parent=11 // pred_region
        _
      $region20: #{tpu_custom_call.1} parent=11 // pred_fallthru
        _
      // Predicated region
      $region21: #{tpu_custom_call.1} parent=11 // pred_check
        %p182 = pneg %p112
      $region22: #{tpu_custom_call.1} parent=11 // pred_check_branch
        %184 = sbr.rel (%p182) target = $region24
      $region23: #{tpu_custom_call.1} parent=11 // pred_region
        _
      $region24: #{tpu_custom_call.1} parent=11 // pred_fallthru
        _
      // Predicated region
      $region25: #{tpu_custom_call.1} parent=11 // pred_check
        %p185 = pneg %p133
      $region26: #{tpu_custom_call.1} parent=11 // pred_check_branch
        %187 = sbr.rel (%p185) target = $region28
      $region27: #{tpu_custom_call.1} parent=11 // pred_region
        _
      $region28: #{tpu_custom_call.1} parent=11 // pred_fallthru
        _
    $region12: #{tpu_custom_call.1} parent=5 // pred_fallthru
      _
    %p188 = scmp.lt.s32.totalorder %s11, 2
    // Predicated region
    $region29: #{tpu_custom_call.1} parent=5 // pred_check
      %p189 = pneg %p188
    $region30: #{tpu_custom_call.1} parent=5 // pred_check_branch
      %191 = sbr.rel (%p189) target = $region32
    $region31: #{tpu_custom_call.1} parent=5 // pred_region
      // Predicated region
      $region33: #{tpu_custom_call.1} parent=31 // pred_check
        %p192 = pneg %p43
      $region34: #{tpu_custom_call.1} parent=31 // pred_check_branch
        %194 = sbr.rel (%p192) target = $region36
      $region35: #{tpu_custom_call.1} parent=31 // pred_region
        %p195 = scmp.lt.s32.totalorder %s18, 1
        %s196 = scalar_select %p195, %s18, 1
        %s197 = smul.addr %s196, 3
        %s198 = smul.addr %s197, 8
        %s199 = scalar_lea.vmem %s0, %s198
      $region36: #{tpu_custom_call.1} parent=31 // pred_fallthru
        _
    $region32: #{tpu_custom_call.1} parent=5 // pred_fallthru
      _
    %p200 = scmp.le.s32.totalorder 1, %s11
    %p201 = scmp.lt.s32.totalorder %s11, 3
    %p202 = pnand %p200, %p201
    %p203 = pneg %p202
    // Predicated region
    $region37: #{tpu_custom_call.1} parent=5 // pred_check
      _
    $region38: #{tpu_custom_call.1} parent=5 // pred_check_branch
      %205 = sbr.rel (%p202) target = $region40
    $region39: #{tpu_custom_call.1} parent=5 // pred_region
      %s206 = ssub.s32 %s11, 1
      %p207 = scmp.lt.s32.totalorder %s20, 1
      %s208 = scalar_select %p207, %s20, 1
      %s209 = smul.addr %s208, 3
      %s210 = smul.addr %s209, 8
      %s211 = scalar_lea.vmem %s0, %s210
      %p212 = pneg %p49
      %p213 = pneg %p46
      %p214 = pneg %p70
      %p215 = pneg %p67
      %p216 = pneg %p91
      %p217 = pneg %p88
      %p218 = pneg %p112
      %p219 = pneg %p109
      %p220 = pneg %p133
      %p221 = pneg %p130
      %p222 = pneg %p161
      %p223 = pneg %p158
      %s224 = smul.u32 2, %s21
      %p225 = scmp.lt.s32.totalorder %s20, 1
      %s226 = scalar_select %p225, %s20, 1
      %p227 = scmp.lt.s32.totalorder %s224, 1
      %s228 = scalar_select %p227, %s224, 1
      %s229 = smul.addr %s226, 2
      %s230 = sadd.s32 %s228, %s229
      %s231 = smul.addr %s230, 8
      %s232 = scalar_lea.vmem %s5, %s231
      %p233 = scmp.lt.s32.totalorder %s20, 1
      %s234 = scalar_select %p233, %s20, 1
      %s235 = smul.addr %s234, 3
      %s236 = smul.addr %s235, 8
      %s237 = scalar_lea.vmem %s0, %s236
      %s238 = smul.u32 2, %s21
      %p239 = scmp.lt.s32.totalorder %s20, 1
      %s240 = scalar_select %p239, %s20, 1
      %p241 = scmp.lt.s32.totalorder %s238, 1
      %s242 = scalar_select %p241, %s238, 1
      %s243 = smul.addr %s240, 2
      %s244 = sadd.s32 %s242, %s243
      %s245 = smul.addr %s244, 8
      %s246 = scalar_lea.vmem %s5, %s245
      %s247 = smul.u32 2, %s21
      %s248 = smul.u32 %s21, 16
      %s249 = scalar_lea.vmem %s237, %s248
      %v250 = vld [vmem:[%s249] sm:$0xff]
      %v251 = vld [vmem:[%s249 + $0x8] sm:$0xff]
      %v252 = vld [vmem:[%s249 + $0x10] sm:$0x3]
      %v253 = vld [vmem:[%s1] sm:$0xff]
      %s254 = sadd.s32 %s248, 1
      %s255 = scalar_lea.vmem %s237, %s254
      %v256 = vld [vmem:[%s255] sm:$0xff]
      %v257 = vld [vmem:[%s255 + $0x8] sm:$0xff]
      %v258 = vld [vmem:[%s255 + $0x10] sm:$0x3]
      %s259 = scalar_lea.vmem %s1, 8
      %v260 = vld [vmem:[%s259] sm:$0xff]
      %vm261 = vcmask 64512
      %v263 = vsel %vm261, %v256, 0
      %v266 = vsel %vm261, %v257, 0
      %v269 = vsel %vm261, %v258, 0
      %271 = vmatprep.subr.mxu0 0.0
      %272 = vmatpush1.msra.mxu0 %v260
      %273 = vmatprep.subr.mxu0 0.0
      %274 = vmatpush1.msra.mxu0 0.0
      %275 = vmatprep.subr.mxu0 0.0
      %276 = vmatpush1.msra.mxu0 0.0
      %277 = vmatprep.subr.mxu0 0.0
      %278 = vmatpush1.msra.mxu0 0.0
      %279 = vmatprep.subr.mxu0 0.0
      %280 = vmatpush1.msra.mxu0 0.0
      %281 = vmatprep.subr.mxu0 0.0
      %282 = vmatpush1.msra.mxu0 0.0
      %283 = vmatprep.subr.mxu0 0.0
      %284 = vmatpush1.msra.mxu0 0.0
      %285 = vmatprep.subr.mxu0 0.0
      %286 = vmatpush1.msra.mxu0 0.0
      %287 = vmatprep.subr.mxu0 0.0
      %288 = vmatpush1.msra.mxu0 0.0
      %289 = vmatprep.subr.mxu0 0.0
      %290 = vmatpush1.msra.mxu0 0.0
      %291 = vmatprep.subr.mxu0 0.0
      %292 = vmatpush1.msra.mxu0 0.0
      %293 = vmatprep.subr.mxu0 0.0
      %294 = vmatpush1.msra.mxu0 0.0
      %295 = vmatprep.subr.mxu0 0.0
      %296 = vmatpush1.msra.mxu0 0.0
      %297 = vmatprep.subr.mxu0 0.0
      %298 = vmatpush1.msra.mxu0 0.0
      %299 = vmatprep.subr.mxu0 0.0
      %300 = vmatpush1.msra.mxu0 0.0
      %301 = vmatprep.subr.mxu0 0.0
      %302 = vmatpush1.msra.mxu0 0.0
      %303 = vmatprep.subr.mxu0 0.0
      %304 = vmatpush1.msra.mxu0 0.0
      %305 = vmatprep.subr.mxu0 0.0
      %306 = vmatpush1.msra.mxu0 0.0
      %307 = vmatprep.subr.mxu0 0.0
      %308 = vmatpush1.msra.mxu0 0.0
      %309 = vmatprep.subr.mxu0 0.0
      %310 = vmatpush1.msra.mxu0 0.0
      %311 = vmatprep.subr.mxu0 0.0
      %312 = vmatpush1.msra.mxu0 0.0
      %313 = vmatprep.subr.mxu0 0.0
      %314 = vmatpush1.msra.mxu0 0.0
      %315 = vmatprep.subr.mxu0 0.0
      %316 = vmatpush1.msra.mxu0 0.0
      %317 = vmatprep.subr.mxu0 0.0
      %318 = vmatpush1.msra.mxu0 0.0
      %319 = vmatprep.subr.mxu0 0.0
      %320 = vmatpush1.msra.mxu0 0.0
      %321 = vmatprep.subr.mxu0 0.0
      %322 = vmatpush1.msra.mxu0 0.0
      %323 = vmatprep.subr.mxu0 0.0
      %324 = vmatpush1.msra.mxu0 0.0
      %325 = vmatprep.subr.mxu0 0.0
      %326 = vmatpush1.msra.mxu0 0.0
      %327 = vmatprep.subr.mxu0 0.0
      %328 = vmatpush1.msra.mxu0 0.0
      %329 = vmatprep.subr.mxu0 0.0
      %330 = vmatpush1.msra.mxu0 0.0
      %331 = vmatprep.subr.mxu0 0.0
      %332 = vmatpush1.msra.mxu0 0.0
      %333 = vmatprep.subr.mxu0 0.0
      %334 = vmatpush1.msra.mxu0 0.0
      %335 = vmatprep.mubr.f32.mxu0 0.0
      %336 = vmatmul.mubr.f32.gmra.mrb[0].mxu0 %v263
      %v337 = vpop.f32.mrb[0].mxu0
      %v338 = vadd.f32 0.0, %v337
      %v339 = vpop.f32.mrb[0].mxu0
      %340 = vmatprep.mubr.f32.mxu0 0.0
      %341 = vmatmul.mubr.f32.gmra.mrb[0].mxu0 %v266
      %v342 = vpop.f32.mrb[0].mxu0
      %v343 = vadd.f32 0.0, %v342
      %v344 = vpop.f32.mrb[0].mxu0
      %345 = vmatprep.mubr.f32.mxu0 0.0
      %346 = vmatmul.mubr.f32.gmra.mrb[0].mxu0 %v269
      %v347 = vpop.f32.mrb[0].mxu0
      %v348 = vadd.f32 0.0, %v347
      %v349 = vpop.f32.mrb[0].mxu0
      %350 = vdwg.mxu0
      %v352 = vsel %vm261, %v250, 0
      %v355 = vsel %vm261, %v251, 0
      %v358 = vsel %vm261, %v252, 0
      %360 = vmatprep.subr.mxu0 0.0
      %361 = vmatpush1.msra.mxu0 %v253
      %362 = vmatprep.subr.mxu0 0.0
      %363 = vmatpush1.msra.mxu0 0.0
      %364 = vmatprep.subr.mxu0 0.0
      %365 = vmatpush1.msra.mxu0 0.0
      %366 = vmatprep.subr.mxu0 0.0
      %367 = vmatpush1.msra.mxu0 0.0
      %368 = vmatprep.subr.mxu0 0.0
      %369 = vmatpush1.msra.mxu0 0.0
      %370 = vmatprep.subr.mxu0 0.0
      %371 = vmatpush1.msra.mxu0 0.0
      %372 = vmatprep.subr.mxu0 0.0
      %373 = vmatpush1.msra.mxu0 0.0
      %374 = vmatprep.subr.mxu0 0.0
      %375 = vmatpush1.msra.mxu0 0.0
      %376 = vmatprep.subr.mxu0 0.0
      %377 = vmatpush1.msra.mxu0 0.0
      %378 = vmatprep.subr.mxu0 0.0
      %379 = vmatpush1.msra.mxu0 0.0
      %380 = vmatprep.subr.mxu0 0.0
      %381 = vmatpush1.msra.mxu0 0.0
      %382 = vmatprep.subr.mxu0 0.0
      %383 = vmatpush1.msra.mxu0 0.0
      %384 = vmatprep.subr.mxu0 0.0
      %385 = vmatpush1.msra.mxu0 0.0
      %386 = vmatprep.subr.mxu0 0.0
      %387 = vmatpush1.msra.mxu0 0.0
      %388 = vmatprep.subr.mxu0 0.0
      %389 = vmatpush1.msra.mxu0 0.0
      %390 = vmatprep.subr.mxu0 0.0
      %391 = vmatpush1.msra.mxu0 0.0
      %392 = vmatprep.subr.mxu0 0.0
      %393 = vmatpush1.msra.mxu0 0.0
      %394 = vmatprep.subr.mxu0 0.0
      %395 = vmatpush1.msra.mxu0 0.0
      %396 = vmatprep.subr.mxu0 0.0
      %397 = vmatpush1.msra.mxu0 0.0
      %398 = vmatprep.subr.mxu0 0.0
      %399 = vmatpush1.msra.mxu0 0.0
      %400 = vmatprep.subr.mxu0 0.0
      %401 = vmatpush1.msra.mxu0 0.0
      %402 = vmatprep.subr.mxu0 0.0
      %403 = vmatpush1.msra.mxu0 0.0
      %404 = vmatprep.subr.mxu0 0.0
      %405 = vmatpush1.msra.mxu0 0.0
      %406 = vmatprep.subr.mxu0 0.0
      %407 = vmatpush1.msra.mxu0 0.0
      %408 = vmatprep.subr.mxu0 0.0
      %409 = vmatpush1.msra.mxu0 0.0
      %410 = vmatprep.subr.mxu0 0.0
      %411 = vmatpush1.msra.mxu0 0.0
      %412 = vmatprep.subr.mxu0 0.0
      %413 = vmatpush1.msra.mxu0 0.0
      %414 = vmatprep.subr.mxu0 0.0
      %415 = vmatpush1.msra.mxu0 0.0
      %416 = vmatprep.subr.mxu0 0.0
      %417 = vmatpush1.msra.mxu0 0.0
      %418 = vmatprep.subr.mxu0 0.0
      %419 = vmatpush1.msra.mxu0 0.0
      %420 = vmatprep.subr.mxu0 0.0
      %421 = vmatpush1.msra.mxu0 0.0
      %422 = vmatprep.subr.mxu0 0.0
      %423 = vmatpush1.msra.mxu0 0.0
      %424 = vmatprep.mubr.f32.mxu0 0.0
      %425 = vmatmul.mubr.f32.gmra.mrb[0].mxu0 %v352
      %v426 = vpop.f32.mrb[0].mxu0
      %v427 = vadd.f32 %v338, %v426
      %v428 = vpop.f32.mrb[0].mxu0
      %429 = vmatprep.mubr.f32.mxu0 0.0
      %430 = vmatmul.mubr.f32.gmra.mrb[0].mxu0 %v355
      %v431 = vpop.f32.mrb[0].mxu0
      %v432 = vadd.f32 %v343, %v431
      %v433 = vpop.f32.mrb[0].mxu0
      %434 = vmatprep.mubr.f32.mxu0 0.0
      %435 = vmatmul.mubr.f32.gmra.mrb[0].mxu0 %v358
      %v436 = vpop.f32.mrb[0].mxu0
      %v437 = vadd.f32 %v348, %v436
      %v438 = vpop.f32.mrb[0].mxu0
      %439 = vdwg.mxu0
      %s440 = sadd.s32 %s248, 2
      %s441 = scalar_lea.vmem %s237, %s440
      %v442 = vld [vmem:[%s441] sm:$0xff]
      %v443 = vld [vmem:[%s441 + $0x8] sm:$0xff]
      %v444 = vld [vmem:[%s441 + $0x10] sm:$0x3]
      %s445 = scalar_lea.vmem %s1, 16
      %v446 = vld [vmem:[%s445] sm:$0xff]
      %v448 = vsel %vm261, %v442, 0
      %v451 = vsel %vm261, %v443, 0
      %v454 = vsel %vm261, %v444, 0
      %456 = vmatprep.subr.mxu0 0.0
      %457 = vmatpush1.msra.mxu0 %v446
      %458 = vmatprep.subr.mxu0 0.0
      %459 = vmatpush1.msra.mxu0 0.0
      %460 = vmatprep.subr.mxu0 0.0
      %461 = vmatpush1.msra.mxu0 0.0
      %462 = vmatprep.subr.mxu0 0.0
      %463 = vmatpush1.msra.mxu0 0.0
      %464 = vmatprep.subr.mxu0 0.0
      %465 = vmatpush1.msra.mxu0 0.0
      %466 = vmatprep.subr.mxu0 0.0
      %467 = vmatpush1.msra.mxu0 0.0
      %468 = vmatprep.subr.mxu0 0.0
      %469 = vmatpush1.msra.mxu0 0.0
      %470 = vmatprep.subr.mxu0 0.0
      %471 = vmatpush1.msra.mxu0 0.0
      %472 = vmatprep.subr.mxu0 0.0
      %473 = vmatpush1.msra.mxu0 0.0
      %474 = vmatprep.subr.mxu0 0.0
      %475 = vmatpush1.msra.mxu0 0.0
      %476 = vmatprep.subr.mxu0 0.0
      %477 = vmatpush1.msra.mxu0 0.0
      %478 = vmatprep.subr.mxu0 0.0
      %479 = vmatpush1.msra.mxu0 0.0
      %480 = vmatprep.subr.mxu0 0.0
      %481 = vmatpush1.msra.mxu0 0.0
      %482 = vmatprep.subr.mxu0 0.0
      %483 = vmatpush1.msra.mxu0 0.0
      %484 = vmatprep.subr.mxu0 0.0
      %485 = vmatpush1.msra.mxu0 0.0
      %486 = vmatprep.subr.mxu0 0.0
      %487 = vmatpush1.msra.mxu0 0.0
      %488 = vmatprep.subr.mxu0 0.0
      %489 = vmatpush1.msra.mxu0 0.0
      %490 = vmatprep.subr.mxu0 0.0
      %491 = vmatpush1.msra.mxu0 0.0
      %492 = vmatprep.subr.mxu0 0.0
      %493 = vmatpush1.msra.mxu0 0.0
      %494 = vmatprep.subr.mxu0 0.0
      %495 = vmatpush1.msra.mxu0 0.0
      %496 = vmatprep.subr.mxu0 0.0
      %497 = vmatpush1.msra.mxu0 0.0
      %498 = vmatprep.subr.mxu0 0.0
      %499 = vmatpush1.msra.mxu0 0.0
      %500 = vmatprep.subr.mxu0 0.0
      %501 = vmatpush1.msra.mxu0 0.0
      %502 = vmatprep.subr.mxu0 0.0
      %503 = vmatpush1.msra.mxu0 0.0
      %504 = vmatprep.subr.mxu0 0.0
      %505 = vmatpush1.msra.mxu0 0.0
      %506 = vmatprep.subr.mxu0 0.0
      %507 = vmatpush1.msra.mxu0 0.0
      %508 = vmatprep.subr.mxu0 0.0
      %509 = vmatpush1.msra.mxu0 0.0
      %510 = vmatprep.subr.mxu0 0.0
      %511 = vmatpush1.msra.mxu0 0.0
      %512 = vmatprep.subr.mxu0 0.0
      %513 = vmatpush1.msra.mxu0 0.0
      %514 = vmatprep.subr.mxu0 0.0
      %515 = vmatpush1.msra.mxu0 0.0
      %516 = vmatprep.subr.mxu0 0.0
      %517 = vmatpush1.msra.mxu0 0.0
      %518 = vmatprep.subr.mxu0 0.0
      %519 = vmatpush1.msra.mxu0 0.0
      %520 = vmatprep.mubr.f32.mxu0 0.0
      %521 = vmatmul.mubr.f32.gmra.mrb[0].mxu0 %v448
      %v522 = vpop.f32.mrb[0].mxu0
      %v523 = vadd.f32 0.0, %v522
      %v524 = vpop.f32.mrb[0].mxu0
      %525 = vmatprep.mubr.f32.mxu0 0.0
      %526 = vmatmul.mubr.f32.gmra.mrb[0].mxu0 %v451
      %v527 = vpop.f32.mrb[0].mxu0
      %v528 = vadd.f32 0.0, %v527
      %v529 = vpop.f32.mrb[0].mxu0
      %530 = vmatprep.mubr.f32.mxu0 0.0
      %531 = vmatmul.mubr.f32.gmra.mrb[0].mxu0 %v454
      %v532 = vpop.f32.mrb[0].mxu0
      %v533 = vadd.f32 0.0, %v532
      %v534 = vpop.f32.mrb[0].mxu0
      %535 = vdwg.mxu0
      %v536 = vadd.f32 %v427, %v523
      %v537 = vadd.f32 %v432, %v528
      %v538 = vadd.f32 %v437, %v533
      %v539 = vld [vmem:[%s2] sm:$0x1]
      %v541 = vlaneseq
      %v542 = vshrl.u32 %v541, 7
      %v543 = vsub.s32 0, %v542
      %v544 = vrot.slane %v539, %v543
      %v546 = vadd.f32 %v536, %v544
      %v547 = vadd.f32 %v537, %v544
      %v548 = vadd.f32 %v538, %v544
      %v549 = vmax.f32 %v546, 0.0
      %v550 = vmax.f32 %v547, 0.0
      %v551 = vmax.f32 %v548, 0.0
      %vm552 = vcmask 261120
      %553 = vst.msk [vmem:[#allocation2] sm:$0xff] %vm552, %v549
      %554 = vst.msk [vmem:[#allocation2 + $0x8] sm:$0xff] %vm552, %v550
      %vm555 = vcmask 254976
      %556 = vst.msk [vmem:[#allocation2 + $0x10] sm:$0x3] %vm555, %v551
      %p557 = scmp.lt.s32.totalorder %s248, 1
      %s558 = sadd.s32 %s248, 17
      %p559 = scmp.gt.s32.totalorder %s558, 16
      %p560 = por %p557, %p559
      // Predicated region
      $region41: #{tpu_custom_call.1} parent=39 // pred_check
        %p561 = pneg %p560
      $region42: #{tpu_custom_call.1} parent=39 // pred_check_branch
        %563 = sbr.rel (%p561) target = $region44
      $region43: #{tpu_custom_call.1} parent=39 // pred_region
        %s564 = ssub.s32 %s248, 1
        %v565 = vlaneseq
        %v566 = vshrl.u32 %v565, 7
        %v567 = vadd.s32 %v566, 8
        %v568 = vadd.s32 %v566, 16
        %v569 = vstv %s564
        %v570 = vadd.s32 %v569, %v566
        %v571 = vadd.s32 %v569, %v567
        %v572 = vadd.s32 %v569, %v568
        %vm573 = vcmp.ge.s32.totalorder %v570, 0
        %vm574 = vcmp.ge.s32.totalorder %v571, 0
        %vm575 = vcmp.ge.s32.totalorder %v572, 0
        %vm576 = vcmp.lt.s32.totalorder %v570, 16
        %vm577 = vcmp.lt.s32.totalorder %v571, 16
        %vm578 = vcmp.lt.s32.totalorder %v572, 16
        %vm579 = vmand %vm573, %vm576
        %vm580 = vmand %vm574, %vm577
        %vm581 = vmand %vm575, %vm578
        %v582 = vld [vmem:[#allocation2] sm:$0xff]
        %v583 = vld [vmem:[#allocation2 + $0x8] sm:$0xff]
        %v584 = vld [vmem:[#allocation2 + $0x10] sm:$0x3]
        %v585 = vsel %vm579, 1, 0
        %v586 = vsel %vm580, 1, 0
        %v587 = vsel %vm581, 1, 0
        %vm588 = vcmp.eq.s32.totalorder %v585, 1
        %vm589 = vcmp.eq.s32.totalorder %v586, 1
        %vm590 = vcmp.eq.s32.totalorder %v587, 1
        %v591 = vsel %vm588, %v582, 0.0
        %v592 = vsel %vm589, %v583, 0.0
        %v593 = vsel %vm590, %v584, 0.0
        %594 = vst.msk [vmem:[#allocation2] sm:$0xff] %vm552, %v591
        %595 = vst.msk [vmem:[#allocation2 + $0x8] sm:$0xff] %vm552, %v592
        %596 = vst.msk [vmem:[#allocation2 + $0x10] sm:$0x3] %vm555, %v593
      $region44: #{tpu_custom_call.1} parent=39 // pred_fallthru
        _
      %v597 = vld [vmem:[#allocation2] sm:$0xff]
      %v598 = vld [vmem:[#allocation2 + $0x8] sm:$0xff]
      %v599 = vld [vmem:[%s3] sm:$0xff]
      %v600 = vld [vmem:[%s3 + $0x8] sm:$0xff]
      %v601 = vld [vmem:[%s3 + $0x10] sm:$0xff]
      %v602 = vld [vmem:[%s3 + $0x18] sm:$0xff]
      %v603 = vld [vmem:[#allocation2 + $0x1] sm:$0xff]
      %v604 = vld [vmem:[#allocation2 + $0x9] sm:$0xff]
      %s605 = scalar_lea.vmem %s3, 32
      %v606 = vld [vmem:[%s605] sm:$0xff]
      %v607 = vld [vmem:[%s605 + $0x8] sm:$0xff]
      %v608 = vld [vmem:[%s605 + $0x10] sm:$0xff]
      %v609 = vld [vmem:[%s605 + $0x18] sm:$0xff]
      %v611 = vsel %vm552, %v603, 0
      %v614 = vsel %vm552, %v604, 0
      %616 = vmatprep.subr.mxu0 0.0
      %617 = vmatpush1.msra.mxu0 %v606
      %618 = vmatprep.subr.mxu0 0.0
      %619 = vmatpush1.msra.mxu0 %v607
      %620 = vmatprep.subr.mxu0 0.0
      %621 = vmatpush1.msra.mxu0 %v608
      %622 = vmatprep.subr.mxu0 0.0
      %623 = vmatpush1.msra.mxu0 %v609
      %624 = vmatprep.subr.mxu0 0.0
      %625 = vmatpush1.msra.mxu0 0.0
      %626 = vmatprep.subr.mxu0 0.0
      %627 = vmatpush1.msra.mxu0 0.0
      %628 = vmatprep.subr.mxu0 0.0
      %629 = vmatpush1.msra.mxu0 0.0
      %630 = vmatprep.subr.mxu0 0.0
      %631 = vmatpush1.msra.mxu0 0.0
      %632 = vmatprep.subr.mxu0 0.0
      %633 = vmatpush1.msra.mxu0 0.0
      %634 = vmatprep.subr.mxu0 0.0
      %635 = vmatpush1.msra.mxu0 0.0
      %636 = vmatprep.subr.mxu0 0.0
      %637 = vmatpush1.msra.mxu0 0.0
      %638 = vmatprep.subr.mxu0 0.0
      %639 = vmatpush1.msra.mxu0 0.0
      %640 = vmatprep.subr.mxu0 0.0
      %641 = vmatpush1.msra.mxu0 0.0
      %642 = vmatprep.subr.mxu0 0.0
      %643 = vmatpush1.msra.mxu0 0.0
      %644 = vmatprep.subr.mxu0 0.0
      %645 = vmatpush1.msra.mxu0 0.0
      %646 = vmatprep.subr.mxu0 0.0
      %647 = vmatpush1.msra.mxu0 0.0
      %648 = vmatprep.subr.mxu0 0.0
      %649 = vmatpush1.msra.mxu0 0.0
      %650 = vmatprep.subr.mxu0 0.0
      %651 = vmatpush1.msra.mxu0 0.0
      %652 = vmatprep.subr.mxu0 0.0
      %653 = vmatpush1.msra.mxu0 0.0
      %654 = vmatprep.subr.mxu0 0.0
      %655 = vmatpush1.msra.mxu0 0.0
      %656 = vmatprep.subr.mxu0 0.0
      %657 = vmatpush1.msra.mxu0 0.0
      %658 = vmatprep.subr.mxu0 0.0
      %659 = vmatpush1.msra.mxu0 0.0
      %660 = vmatprep.subr.mxu0 0.0
      %661 = vmatpush1.msra.mxu0 0.0
      %662 = vmatprep.subr.mxu0 0.0
      %663 = vmatpush1.msra.mxu0 0.0
      %664 = vmatprep.subr.mxu0 0.0
      %665 = vmatpush1.msra.mxu0 0.0
      %666 = vmatprep.subr.mxu0 0.0
      %667 = vmatpush1.msra.mxu0 0.0
      %668 = vmatprep.subr.mxu0 0.0
      %669 = vmatpush1.msra.mxu0 0.0
      %670 = vmatprep.subr.mxu0 0.0
      %671 = vmatpush1.msra.mxu0 0.0
      %672 = vmatprep.subr.mxu0 0.0
      %673 = vmatpush1.msra.mxu0 0.0
      %674 = vmatprep.subr.mxu0 0.0
      %675 = vmatpush1.msra.mxu0 0.0
      %676 = vmatprep.subr.mxu0 0.0
      %677 = vmatpush1.msra.mxu0 0.0
      %678 = vmatprep.subr.mxu0 0.0
      %679 = vmatpush1.msra.mxu0 0.0
      %680 = vmatprep.mubr.f32.mxu0 0.0
      %681 = vmatmul.mubr.f32.gmra.mrb[0].mxu0 %v611
      %v682 = vpop.f32.mrb[0].mxu0
      %v683 = vadd.f32 0.0, %v682
      %v684 = vpop.f32.mrb[0].mxu0
      %685 = vmatprep.mubr.f32.mxu0 0.0
      %686 = vmatmul.mubr.f32.gmra.mrb[0].mxu0 %v614
      %v687 = vpop.f32.mrb[0].mxu0
      %v688 = vadd.f32 0.0, %v687
      %v689 = vpop.f32.mrb[0].mxu0
      %690 = vdwg.mxu0
      %v692 = vsel %vm552, %v597, 0
      %v695 = vsel %vm552, %v598, 0
      %697 = vmatprep.subr.mxu0 0.0
      %698 = vmatpush1.msra.mxu0 %v599
      %699 = vmatprep.subr.mxu0 0.0
      %700 = vmatpush1.msra.mxu0 %v600
      %701 = vmatprep.subr.mxu0 0.0
      %702 = vmatpush1.msra.mxu0 %v601
      %703 = vmatprep.subr.mxu0 0.0
      %704 = vmatpush1.msra.mxu0 %v602
      %705 = vmatprep.subr.mxu0 0.0
      %706 = vmatpush1.msra.mxu0 0.0
      %707 = vmatprep.subr.mxu0 0.0
      %708 = vmatpush1.msra.mxu0 0.0
      %709 = vmatprep.subr.mxu0 0.0
      %710 = vmatpush1.msra.mxu0 0.0
      %711 = vmatprep.subr.mxu0 0.0
      %712 = vmatpush1.msra.mxu0 0.0
      %713 = vmatprep.subr.mxu0 0.0
      %714 = vmatpush1.msra.mxu0 0.0
      %715 = vmatprep.subr.mxu0 0.0
      %716 = vmatpush1.msra.mxu0 0.0
      %717 = vmatprep.subr.mxu0 0.0
      %718 = vmatpush1.msra.mxu0 0.0
      %719 = vmatprep.subr.mxu0 0.0
      %720 = vmatpush1.msra.mxu0 0.0
      %721 = vmatprep.subr.mxu0 0.0
      %722 = vmatpush1.msra.mxu0 0.0
      %723 = vmatprep.subr.mxu0 0.0
      %724 = vmatpush1.msra.mxu0 0.0
      %725 = vmatprep.subr.mxu0 0.0
      %726 = vmatpush1.msra.mxu0 0.0
      %727 = vmatprep.subr.mxu0 0.0
      %728 = vmatpush1.msra.mxu0 0.0
      %729 = vmatprep.subr.mxu0 0.0
      %730 = vmatpush1.msra.mxu0 0.0
      %731 = vmatprep.subr.mxu0 0.0
      %732 = vmatpush1.msra.mxu0 0.0
      %733 = vmatprep.subr.mxu0 0.0
      %734 = vmatpush1.msra.mxu0 0.0
      %735 = vmatprep.subr.mxu0 0.0
      %736 = vmatpush1.msra.mxu0 0.0
      %737 = vmatprep.subr.mxu0 0.0
      %738 = vmatpush1.msra.mxu0 0.0
      %739 = vmatprep.subr.mxu0 0.0
      %740 = vmatpush1.msra.mxu0 0.0
      %741 = vmatprep.subr.mxu0 0.0
      %742 = vmatpush1.msra.mxu0 0.0
      %743 = vmatprep.subr.mxu0 0.0
      %744 = vmatpush1.msra.mxu0 0.0
      %745 = vmatprep.subr.mxu0 0.0
      %746 = vmatpush1.msra.mxu0 0.0
      %747 = vmatprep.subr.mxu0 0.0
      %748 = vmatpush1.msra.mxu0 0.0
      %749 = vmatprep.subr.mxu0 0.0
      %750 = vmatpush1.msra.mxu0 0.0
      %751 = vmatprep.subr.mxu0 0.0
      %752 = vmatpush1.msra.mxu0 0.0
      %753 = vmatprep.subr.mxu0 0.0
      %754 = vmatpush1.msra.mxu0 0.0
      %755 = vmatprep.subr.mxu0 0.0
      %756 = vmatpush1.msra.mxu0 0.0
      %757 = vmatprep.subr.mxu0 0.0
      %758 = vmatpush1.msra.mxu0 0.0
      %759 = vmatprep.subr.mxu0 0.0
      %760 = vmatpush1.msra.mxu0 0.0
      %761 = vmatprep.mubr.f32.mxu0 0.0
      %762 = vmatmul.mubr.f32.gmra.mrb[0].mxu0 %v692
      %v763 = vpop.f32.mrb[0].mxu0
      %v764 = vadd.f32 %v683, %v763
      %v765 = vpop.f32.mrb[0].mxu0
      %766 = vmatprep.mubr.f32.mxu0 0.0
      %767 = vmatmul.mubr.f32.gmra.mrb[0].mxu0 %v695
      %v768 = vpop.f32.mrb[0].mxu0
      %v769 = vadd.f32 %v688, %v768
      %v770 = vpop.f32.mrb[0].mxu0
      %771 = vdwg.mxu0
      %v772 = vld [vmem:[#allocation2 + $0x2] sm:$0xff]
      %v773 = vld [vmem:[#allocation2 + $0xa] sm:$0xff]
      %s774 = scalar_lea.vmem %s3, 64
      %v775 = vld [vmem:[%s774] sm:$0xff]
      %v776 = vld [vmem:[%s774 + $0x8] sm:$0xff]
      %v777 = vld [vmem:[%s774 + $0x10] sm:$0xff]
      %v778 = vld [vmem:[%s774 + $0x18] sm:$0xff]
      %v780 = vsel %vm552, %v772, 0
      %v783 = vsel %vm552, %v773, 0
      %785 = vmatprep.subr.mxu0 0.0
      %786 = vmatpush1.msra.mxu0 %v775
      %787 = vmatprep.subr.mxu0 0.0
      %788 = vmatpush1.msra.mxu0 %v776
      %789 = vmatprep.subr.mxu0 0.0
      %790 = vmatpush1.msra.mxu0 %v777
      %791 = vmatprep.subr.mxu0 0.0
      %792 = vmatpush1.msra.mxu0 %v778
      %793 = vmatprep.subr.mxu0 0.0
      %794 = vmatpush1.msra.mxu0 0.0
      %795 = vmatprep.subr.mxu0 0.0
      %796 = vmatpush1.msra.mxu0 0.0
      %797 = vmatprep.subr.mxu0 0.0
      %798 = vmatpush1.msra.mxu0 0.0
      %799 = vmatprep.subr.mxu0 0.0
      %800 = vmatpush1.msra.mxu0 0.0
      %801 = vmatprep.subr.mxu0 0.0
      %802 = vmatpush1.msra.mxu0 0.0
      %803 = vmatprep.subr.mxu0 0.0
      %804 = vmatpush1.msra.mxu0 0.0
      %805 = vmatprep.subr.mxu0 0.0
      %806 = vmatpush1.msra.mxu0 0.0
      %807 = vmatprep.subr.mxu0 0.0
      %808 = vmatpush1.msra.mxu0 0.0
      %809 = vmatprep.subr.mxu0 0.0
      %810 = vmatpush1.msra.mxu0 0.0
      %811 = vmatprep.subr.mxu0 0.0
      %812 = vmatpush1.msra.mxu0 0.0
      %813 = vmatprep.subr.mxu0 0.0
      %814 = vmatpush1.msra.mxu0 0.0
      %815 = vmatprep.subr.mxu0 0.0
      %816 = vmatpush1.msra.mxu0 0.0
      %817 = vmatprep.subr.mxu0 0.0
      %818 = vmatpush1.msra.mxu0 0.0
      %819 = vmatprep.subr.mxu0 0.0
      %820 = vmatpush1.msra.mxu0 0.0
      %821 = vmatprep.subr.mxu0 0.0
      %822 = vmatpush1.msra.mxu0 0.0
      %823 = vmatprep.subr.mxu0 0.0
      %824 = vmatpush1.msra.mxu0 0.0
      %825 = vmatprep.subr.mxu0 0.0
      %826 = vmatpush1.msra.mxu0 0.0
      %827 = vmatprep.subr.mxu0 0.0
      %828 = vmatpush1.msra.mxu0 0.0
      %829 = vmatprep.subr.mxu0 0.0
      %830 = vmatpush1.msra.mxu0 0.0
      %831 = vmatprep.subr.mxu0 0.0
      %832 = vmatpush1.msra.mxu0 0.0
      %833 = vmatprep.subr.mxu0 0.0
      %834 = vmatpush1.msra.mxu0 0.0
      %835 = vmatprep.subr.mxu0 0.0
      %836 = vmatpush1.msra.mxu0 0.0
      %837 = vmatprep.subr.mxu0 0.0
      %838 = vmatpush1.msra.mxu0 0.0
      %839 = vmatprep.subr.mxu0 0.0
      %840 = vmatpush1.msra.mxu0 0.0
      %841 = vmatprep.subr.mxu0 0.0
      %842 = vmatpush1.msra.mxu0 0.0
      %843 = vmatprep.subr.mxu0 0.0
      %844 = vmatpush1.msra.mxu0 0.0
      %845 = vmatprep.subr.mxu0 0.0
      %846 = vmatpush1.msra.mxu0 0.0
      %847 = vmatprep.subr.mxu0 0.0
      %848 = vmatpush1.msra.mxu0 0.0
      %849 = vmatprep.mubr.f32.mxu0 0.0
      %850 = vmatmul.mubr.f32.gmra.mrb[0].mxu0 %v780
      %v851 = vpop.f32.mrb[0].mxu0
      %v852 = vadd.f32 0.0, %v851
      %v853 = vpop.f32.mrb[0].mxu0
      %854 = vmatprep.mubr.f32.mxu0 0.0
      %855 = vmatmul.mubr.f32.gmra.mrb[0].mxu0 %v783
      %v856 = vpop.f32.mrb[0].mxu0
      %v857 = vadd.f32 0.0, %v856
      %v858 = vpop.f32.mrb[0].mxu0
      %859 = vdwg.mxu0
      %v860 = vadd.f32 %v764, %v852
      %v861 = vadd.f32 %v769, %v857
      %v862 = vld [vmem:[%s4] sm:$0x1]
      %v864 = vlaneseq
      %v865 = vshrl.u32 %v864, 7
      %v866 = vsub.s32 0, %v865
      %v867 = vrot.slane %v862, %v866
      %v869 = vadd.f32 %v860, %v867
      %v870 = vadd.f32 %v861, %v867
      %871 = vst.msk [vmem:[%s246] sm:$0xff] %vm261, %v869
      %872 = vst.msk [vmem:[%s246 + $0x8] sm:$0xff] %vm261, %v870
      %s873 = smul.u32 2, %s21
      %p874 = scmp.lt.s32.totalorder %s20, 1
      %s875 = scalar_select %p874, %s20, 1
      %p876 = scmp.lt.s32.totalorder %s873, 1
      %s877 = scalar_select %p876, %s873, 1
      %s878 = smul.addr %s875, 2
      %s879 = sadd.s32 %s877, %s878
      %s880 = smul.addr %s879, 8
      %s881 = scalar_lea.vmem %s5, %s880
      // Predicated region
      $region45: #{tpu_custom_call.1} parent=39 // pred_check
        %p882 = pneg %p158
      $region46: #{tpu_custom_call.1} parent=39 // pred_check_branch
        %884 = sbr.rel (%p882) target = $region48
      $region47: #{tpu_custom_call.1} parent=39 // pred_region
        %s885 = smul.u32 2, %s21
      $region48: #{tpu_custom_call.1} parent=39 // pred_fallthru
        _
    $region40: #{tpu_custom_call.1} parent=5 // pred_fallthru
      _
    %p886 = scmp.le.s32.totalorder 2, %s11
    // Predicated region
    $region49: #{tpu_custom_call.1} parent=5 // pred_check
      %p887 = pneg %p886
    $region50: #{tpu_custom_call.1} parent=5 // pred_check_branch
      %889 = sbr.rel (%p887) target = $region52
    $region51: #{tpu_custom_call.1} parent=5 // pred_region
      %s890 = ssub.s32 %s11, 2
      // Predicated region
      $region53: #{tpu_custom_call.1} parent=51 // pred_check
        %p891 = pneg %p164
      $region54: #{tpu_custom_call.1} parent=51 // pred_check_branch
        %893 = sbr.rel (%p891) target = $region56
      $region55: #{tpu_custom_call.1} parent=51 // pred_region
        %s894 = smul.u32 2, %s23
        %p895 = scmp.lt.s32.totalorder %s22, 1
        %s896 = scalar_select %p895, %s22, 1
        %p897 = scmp.lt.s32.totalorder %s894, 1
        %s898 = scalar_select %p897, %s894, 1
        %s899 = smul.addr %s896, 2
        %s900 = sadd.s32 %s898, %s899
        %s901 = smul.addr %s900, 8
        %s902 = scalar_lea.vmem %s5, %s901
      $region56: #{tpu_custom_call.1} parent=51 // pred_fallthru
        _
    $region52: #{tpu_custom_call.1} parent=5 // pred_fallthru
      _
  $region6: #{tpu_custom_call.1} parent=0 // loop_footer
    %s15 = sadd.s32 1, %s11
  $region7: #{tpu_custom_call.1} parent=0 // loop_footer_branch
    %10 = sbr.rel target = $region3
  $region8: #{tpu_custom_call.1} parent=0 // loop_exit
    _

// kernel: tpu_custom_call.1
$region0: #{tpu_custom_call.1}
  #allocation0 [shape = 'u32[]', space=smem, size = 0x4, offset = 0x4, fixed_abs, tag = 'smem constant byte address 0x4 - core index']
  #allocation1 [shape = 'u32[144,128]{1,0:T(1,128)}', space=vmem, size = 0x12000, scoped, tag = 'internal scratch']
  #allocation2 [shape = 'f32[18,32]{1,0:T(8,128)}', space=vmem, size = 0x3000, scoped, tag = 'scratch operand']
  %s0 = inlined_call_operand.vmem [shape: f32[2,20,8], index: 0, kind: input, shape index: {}]
  %s1 = inlined_call_operand.vmem [shape: f32[3,8,32], index: 1, kind: input, shape index: {}]
  %s2 = inlined_call_operand.vmem [shape: f32[1,32], index: 2, kind: input, shape index: {}]
  %s3 = inlined_call_operand.vmem [shape: f32[3,32,8], index: 3, kind: input, shape index: {}]
  %s4 = inlined_call_operand.vmem [shape: f32[1,8], index: 4, kind: input, shape index: {}]
  %s5 = inlined_call_operand.vmem [shape: f32[2,16,8], index: 5, kind: output, shape index: {}]
  %s6 = sld [smem:[#allocation0]]
  $region57: #{tpu_custom_call.1} parent=0
    _
  %s8 = ssub.s32 1, %s6
  %s9 = scalar_select 0, %s8, %s6
  loop: start=0, step=1, limit=4
  $region2: #{tpu_custom_call.1} parent=0 // loop_pre_header
    _
  $region3: #{tpu_custom_call.1} parent=0 // loop_header
    %s11 = sphi 0, %s15
    %p12 = scmp.ge.s32.totalorder %s11, 4
    %s18 = sphi 0, %s30
    %s19 = sphi 0, %s26
    %s20 = sphi 0, %s18
    %s21 = sphi 0, %s19
    %s22 = sphi 0, %s20
    %s23 = sphi 0, %s21
    %s33 = sphi 0, %s35
    %s36 = sphi 0, %s33
    %s37 = sphi 0, %s36
    %s53 = sphi 0, %s37
    %s57 = sphi 0, %s57
    %s59 = sphi 0, %s57
    %s60 = sphi 0, %s59
    %s74 = sphi 0, %s60
    %s78 = sphi 0, %s78
    %s80 = sphi 0, %s78
    %s81 = sphi 0, %s80
    %s95 = sphi 0, %s81
    %s99 = sphi 0, %s99
    %s101 = sphi 0, %s99
    %s102 = sphi 0, %s101
    %s116 = sphi 0, %s102
    %s120 = sphi 0, %s120
    %s122 = sphi 0, %s120
    %s123 = sphi 0, %s122
    %s137 = sphi 0, %s123
    %s145 = sphi 0, %s147
    %s148 = sphi 0, %s145
    %s149 = sphi 0, %s148
    %s165 = sphi 0, %s149
  $region4: #{tpu_custom_call.1} parent=0 // loop_header_branch
    %14 = sbr.rel (%p12) target = $region8
  $region5: #{tpu_custom_call.1} parent=0 // loop_body
    %s16 = ssub.s32 %s11, 1
    %s17 = ssub.s32 %s11, 2
    %s24 = sadd.s32 1, %s19
    %p25 = scmp.ge.s32.totalorder %s24, 1
    %s26 = scalar_select %p25, 0, %s24
    %s27 = sadd.s32 1, %s18
    %s28 = scalar_select %p25, %s27, %s18
    %p29 = scmp.ge.s32.totalorder %s28, 2
    %s30 = scalar_select %p29, 0, %s28
    %s31 = ssub.s32 %s18, %s30
    %p32 = scmp.eq.s32.totalorder %s31, 0
    %s34 = sadd.s32 %s33, 1
    %s35 = scalar_select %p32, %s33, %s34
    %p38 = pneg %p32
    %p39 = scmp.eq.s32.totalorder %s11, 1
    %p40 = por %p38, %p39
    %p41 = scmp.ne.s32.totalorder %s33, %s36
    %p42 = scmp.eq.s32.totalorder %s11, 0
    %p43 = por %p41, %p42
    %p44 = scmp.ne.s32.totalorder %s33, %s36
    %p45 = scmp.eq.s32.totalorder %s16, 1
    %p46 = por %p44, %p45
    %p47 = scmp.ne.s32.totalorder %s36, %s37
    %p48 = scmp.eq.s32.totalorder %s16, 0
    %p49 = por %p47, %p48
    %p50 = scmp.ne.s32.totalorder %s36, %s37
    %p51 = scmp.eq.s32.totalorder %s17, 1
    %p52 = por %p50, %p51
    %p54 = scmp.ne.s32.totalorder %s37, %s53
    %p55 = scmp.eq.s32.totalorder %s17, 0
    %p56 = por %p54, %p55
    %s58 = sadd.s32 %s57, 1
    %p61 = scmp.eq.s32.totalorder %s11, 1
    %p62 = scmp.ne.s32.totalorder %s57, %s59
    %p63 = scmp.eq.s32.totalorder %s11, 0
    %p64 = por %p62, %p63
    %p65 = scmp.ne.s32.totalorder %s57, %s59
    %p66 = scmp.eq.s32.totalorder %s16, 1
    %p67 = por %p65, %p66
    %p68 = scmp.ne.s32.totalorder %s59, %s60
    %p69 = scmp.eq.s32.totalorder %s16, 0
    %p70 = por %p68, %p69
    %p71 = scmp.ne.s32.totalorder %s59, %s60
    %p72 = scmp.eq.s32.totalorder %s17, 1
    %p73 = por %p71, %p72
    %p75 = scmp.ne.s32.totalorder %s60, %s74
    %p76 = scmp.eq.s32.totalorder %s17, 0
    %p77 = por %p75, %p76
    %s79 = sadd.s32 %s78, 1
    %p82 = scmp.eq.s32.totalorder %s11, 1
    %p83 = scmp.ne.s32.totalorder %s78, %s80
    %p84 = scmp.eq.s32.totalorder %s11, 0
    %p85 = por %p83, %p84
    %p86 = scmp.ne.s32.totalorder %s78, %s80
    %p87 = scmp.eq.s32.totalorder %s16, 1
    %p88 = por %p86, %p87
    %p89 = scmp.ne.s32.totalorder %s80, %s81
    %p90 = scmp.eq.s32.totalorder %s16, 0
    %p91 = por %p89, %p90
    %p92 = scmp.ne.s32.totalorder %s80, %s81
    %p93 = scmp.eq.s32.totalorder %s17, 1
    %p94 = por %p92, %p93
    %p96 = scmp.ne.s32.totalorder %s81, %s95
    %p97 = scmp.eq.s32.totalorder %s17, 0
    %p98 = por %p96, %p97
    %s100 = sadd.s32 %s99, 1
    %p103 = scmp.eq.s32.totalorder %s11, 1
    %p104 = scmp.ne.s32.totalorder %s99, %s101
    %p105 = scmp.eq.s32.totalorder %s11, 0
    %p106 = por %p104, %p105
    %p107 = scmp.ne.s32.totalorder %s99, %s101
    %p108 = scmp.eq.s32.totalorder %s16, 1
    %p109 = por %p107, %p108
    %p110 = scmp.ne.s32.totalorder %s101, %s102
    %p111 = scmp.eq.s32.totalorder %s16, 0
    %p112 = por %p110, %p111
    %p113 = scmp.ne.s32.totalorder %s101, %s102
    %p114 = scmp.eq.s32.totalorder %s17, 1
    %p115 = por %p113, %p114
    %p117 = scmp.ne.s32.totalorder %s102, %s116
    %p118 = scmp.eq.s32.totalorder %s17, 0
    %p119 = por %p117, %p118
    %s121 = sadd.s32 %s120, 1
    %p124 = scmp.eq.s32.totalorder %s11, 1
    %p125 = scmp.ne.s32.totalorder %s120, %s122
    %p126 = scmp.eq.s32.totalorder %s11, 0
    %p127 = por %p125, %p126
    %p128 = scmp.ne.s32.totalorder %s120, %s122
    %p129 = scmp.eq.s32.totalorder %s16, 1
    %p130 = por %p128, %p129
    %p131 = scmp.ne.s32.totalorder %s122, %s123
    %p132 = scmp.eq.s32.totalorder %s16, 0
    %p133 = por %p131, %p132
    %p134 = scmp.ne.s32.totalorder %s122, %s123
    %p135 = scmp.eq.s32.totalorder %s17, 1
    %p136 = por %p134, %p135
    %p138 = scmp.ne.s32.totalorder %s123, %s137
    %p139 = scmp.eq.s32.totalorder %s17, 0
    %p140 = por %p138, %p139
    %s141 = ssub.s32 %s18, %s30
    %s142 = ssub.s32 %s19, %s26
    %s143 = sor.u32 %s141, %s142
    %p144 = scmp.eq.s32.totalorder %s143, 0
    %s146 = sadd.s32 %s145, 1
    %s147 = scalar_select %p144, %s145, %s146
    %p150 = pneg %p144
    %p151 = scmp.eq.s32.totalorder %s11, 1
    %p152 = por %p150, %p151
    %p153 = scmp.ne.s32.totalorder %s145, %s148
    %p154 = scmp.eq.s32.totalorder %s11, 0
    %p155 = por %p153, %p154
    %p156 = scmp.ne.s32.totalorder %s145, %s148
    %p157 = scmp.eq.s32.totalorder %s16, 1
    %p158 = por %p156, %p157
    %p159 = scmp.ne.s32.totalorder %s148, %s149
    %p160 = scmp.eq.s32.totalorder %s16, 0
    %p161 = por %p159, %p160
    %p162 = scmp.ne.s32.totalorder %s148, %s149
    %p163 = scmp.eq.s32.totalorder %s17, 1
    %p164 = por %p162, %p163
    %p166 = scmp.ne.s32.totalorder %s149, %s165
    %p167 = scmp.eq.s32.totalorder %s17, 0
    %p168 = por %p166, %p167
    %p169 = scmp.le.s32.totalorder 1, %s11
    %p170 = scmp.lt.s32.totalorder %s11, 3
    %p171 = pnand %p169, %p170
    %p172 = pneg %p171
    // Predicated region
    $region9: #{tpu_custom_call.1} parent=5 // pred_check
      _
    $region10: #{tpu_custom_call.1} parent=5 // pred_check_branch
      %174 = sbr.rel (%p171) target = $region12
    $region11: #{tpu_custom_call.1} parent=5 // pred_region
      %s175 = ssub.s32 %s11, 1
      // Predicated region
      $region13: #{tpu_custom_call.1} parent=11 // pred_check
        %p176 = pneg %p70
      $region14: #{tpu_custom_call.1} parent=11 // pred_check_branch
        %178 = sbr.rel (%p176) target = $region16
      $region15: #{tpu_custom_call.1} parent=11 // pred_region
        _
      $region16: #{tpu_custom_call.1} parent=11 // pred_fallthru
        _
      // Predicated region
      $region17: #{tpu_custom_call.1} parent=11 // pred_check
        %p179 = pneg %p91
      $region18: #{tpu_custom_call.1} parent=11 // pred_check_branch
        %181 = sbr.rel (%p179) target = $region20
      $region19: #{tpu_custom_call.1} parent=11 // pred_region
        _
      $region20: #{tpu_custom_call.1} parent=11 // pred_fallthru
        _
      // Predicated region
      $region21: #{tpu_custom_call.1} parent=11 // pred_check
        %p182 = pneg %p112
      $region22: #{tpu_custom_call.1} parent=11 // pred_check_branch
        %184 = sbr.rel (%p182) target = $region24
      $region23: #{tpu_custom_call.1} parent=11 // pred_region
        _
      $region24: #{tpu_custom_call.1} parent=11 // pred_fallthru
        _
      // Predicated region
      $region25: #{tpu_custom_call.1} parent=11 // pred_check
        %p185 = pneg %p133
      $region26: #{tpu_custom_call.1} parent=11 // pred_check_branch
        %187 = sbr.rel (%p185) target = $region28
      $region27: #{tpu_custom_call.1} parent=11 // pred_region
        _
      $region28: #{tpu_custom_call.1} parent=11 // pred_fallthru
        _
    $region12: #{tpu_custom_call.1} parent=5 // pred_fallthru
      _
    %p188 = scmp.lt.s32.totalorder %s11, 2
    // Predicated region
    $region29: #{tpu_custom_call.1} parent=5 // pred_check
      %p189 = pneg %p188
    $region30: #{tpu_custom_call.1} parent=5 // pred_check_branch
      %191 = sbr.rel (%p189) target = $region32
    $region31: #{tpu_custom_call.1} parent=5 // pred_region
      // Predicated region
      $region33: #{tpu_custom_call.1} parent=31 // pred_check
        %p192 = pneg %p43
      $region34: #{tpu_custom_call.1} parent=31 // pred_check_branch
        %194 = sbr.rel (%p192) target = $region36
      $region35: #{tpu_custom_call.1} parent=31 // pred_region
        %p195 = scmp.lt.s32.totalorder %s18, 1
        %s196 = scalar_select %p195, %s18, 1
        %s197 = smul.addr %s196, 3
        %s198 = smul.addr %s197, 8
        %s199 = scalar_lea.vmem %s0, %s198
      $region36: #{tpu_custom_call.1} parent=31 // pred_fallthru
        _
    $region32: #{tpu_custom_call.1} parent=5 // pred_fallthru
      _
    %p200 = scmp.le.s32.totalorder 1, %s11
    %p201 = scmp.lt.s32.totalorder %s11, 3
    %p202 = pnand %p200, %p201
    %p203 = pneg %p202
    // Predicated region
    $region37: #{tpu_custom_call.1} parent=5 // pred_check
      _
    $region38: #{tpu_custom_call.1} parent=5 // pred_check_branch
      %205 = sbr.rel (%p202) target = $region40
    $region39: #{tpu_custom_call.1} parent=5 // pred_region
      %s206 = ssub.s32 %s11, 1
      %p207 = scmp.lt.s32.totalorder %s20, 1
      %s208 = scalar_select %p207, %s20, 1
      %s209 = smul.addr %s208, 3
      %s210 = smul.addr %s209, 8
      %s211 = scalar_lea.vmem %s0, %s210
      %p212 = pneg %p49
      %p213 = pneg %p46
      %p214 = pneg %p70
      %p215 = pneg %p67
      %p216 = pneg %p91
      %p217 = pneg %p88
      %p218 = pneg %p112
      %p219 = pneg %p109
      %p220 = pneg %p133
      %p221 = pneg %p130
      %p222 = pneg %p161
      %p223 = pneg %p158
      %s224 = smul.u32 2, %s21
      %p225 = scmp.lt.s32.totalorder %s20, 1
      %s226 = scalar_select %p225, %s20, 1
      %p227 = scmp.lt.s32.totalorder %s224, 1
      %s228 = scalar_select %p227, %s224, 1
      %s229 = smul.addr %s226, 2
      %s230 = sadd.s32 %s228, %s229
      %s231 = smul.addr %s230, 8
      %s232 = scalar_lea.vmem %s5, %s231
      %p233 = scmp.lt.s32.totalorder %s20, 1
      %s234 = scalar_select %p233, %s20, 1
      %s235 = smul.addr %s234, 3
      %s236 = smul.addr %s235, 8
      %s237 = scalar_lea.vmem %s0, %s236
      %s238 = smul.u32 2, %s21
      %p239 = scmp.lt.s32.totalorder %s20, 1
      %s240 = scalar_select %p239, %s20, 1
      %p241 = scmp.lt.s32.totalorder %s238, 1
      %s242 = scalar_select %p241, %s238, 1
      %s243 = smul.addr %s240, 2
      %s244 = sadd.s32 %s242, %s243
      %s245 = smul.addr %s244, 8
      %s246 = scalar_lea.vmem %s5, %s245
      %s247 = smul.u32 2, %s21
      %s248 = smul.u32 %s21, 16
      %s249 = scalar_lea.vmem %s237, %s248
      %v250 = vld [vmem:[%s249] sm:$0xff]
      %v251 = vld [vmem:[%s249 + $0x8] sm:$0xff]
      %v252 = vld [vmem:[%s249 + $0x10] sm:$0x3]
      %v253 = vld [vmem:[%s1] sm:$0xff]
      %s254 = sadd.s32 %s248, 1
      %s255 = scalar_lea.vmem %s237, %s254
      %v256 = vld [vmem:[%s255] sm:$0xff]
      %v257 = vld [vmem:[%s255 + $0x8] sm:$0xff]
      %v258 = vld [vmem:[%s255 + $0x10] sm:$0x3]
      %s259 = scalar_lea.vmem %s1, 8
      %v260 = vld [vmem:[%s259] sm:$0xff]
      %vm261 = vcmask 64512
      %v263 = vsel %vm261, %v256, 0
      %v266 = vsel %vm261, %v257, 0
      %v269 = vsel %vm261, %v258, 0
      %271 = vmatprep.subr.mxu0 0.0
      %272 = vmatpush1.msra.mxu0 %v260
      %273 = vmatprep.subr.mxu0 0.0
      %274 = vmatpush1.msra.mxu0 0.0
      %275 = vmatprep.subr.mxu0 0.0
      %276 = vmatpush1.msra.mxu0 0.0
      %277 = vmatprep.subr.mxu0 0.0
      %278 = vmatpush1.msra.mxu0 0.0
      %279 = vmatprep.subr.mxu0 0.0
      %280 = vmatpush1.msra.mxu0 0.0
      %281 = vmatprep.subr.mxu0 0.0
      %282 = vmatpush1.msra.mxu0 0.0
      %283 = vmatprep.subr.mxu0 0.0
      %284 = vmatpush1.msra.mxu0 0.0
      %285 = vmatprep.subr.mxu0 0.0
      %286 = vmatpush1.msra.mxu0 0.0
      %287 = vmatprep.subr.mxu0 0.0
      %288 = vmatpush1.msra.mxu0 0.0
      %289 = vmatprep.subr.mxu0 0.0
      %290 = vmatpush1.msra.mxu0 0.0
      %291 = vmatprep.subr.mxu0 0.0
      %292 = vmatpush1.msra.mxu0 0.0
      %293 = vmatprep.subr.mxu0 0.0
      %294 = vmatpush1.msra.mxu0 0.0
      %295 = vmatprep.subr.mxu0 0.0
      %296 = vmatpush1.msra.mxu0 0.0
      %297 = vmatprep.subr.mxu0 0.0
      %298 = vmatpush1.msra.mxu0 0.0
      %299 = vmatprep.subr.mxu0 0.0
      %300 = vmatpush1.msra.mxu0 0.0
      %301 = vmatprep.subr.mxu0 0.0
      %302 = vmatpush1.msra.mxu0 0.0
      %303 = vmatprep.subr.mxu0 0.0
      %304 = vmatpush1.msra.mxu0 0.0
      %305 = vmatprep.subr.mxu0 0.0
      %306 = vmatpush1.msra.mxu0 0.0
      %307 = vmatprep.subr.mxu0 0.0
      %308 = vmatpush1.msra.mxu0 0.0
      %309 = vmatprep.subr.mxu0 0.0
      %310 = vmatpush1.msra.mxu0 0.0
      %311 = vmatprep.subr.mxu0 0.0
      %312 = vmatpush1.msra.mxu0 0.0
      %313 = vmatprep.subr.mxu0 0.0
      %314 = vmatpush1.msra.mxu0 0.0
      %315 = vmatprep.subr.mxu0 0.0
      %316 = vmatpush1.msra.mxu0 0.0
      %317 = vmatprep.subr.mxu0 0.0
      %318 = vmatpush1.msra.mxu0 0.0
      %319 = vmatprep.subr.mxu0 0.0
      %320 = vmatpush1.msra.mxu0 0.0
      %321 = vmatprep.subr.mxu0 0.0
      %322 = vmatpush1.msra.mxu0 0.0
      %323 = vmatprep.subr.mxu0 0.0
      %324 = vmatpush1.msra.mxu0 0.0
      %325 = vmatprep.subr.mxu0 0.0
      %326 = vmatpush1.msra.mxu0 0.0
      %327 = vmatprep.subr.mxu0 0.0
      %328 = vmatpush1.msra.mxu0 0.0
      %329 = vmatprep.subr.mxu0 0.0
      %330 = vmatpush1.msra.mxu0 0.0
      %331 = vmatprep.subr.mxu0 0.0
      %332 = vmatpush1.msra.mxu0 0.0
      %333 = vmatprep.subr.mxu0 0.0
      %334 = vmatpush1.msra.mxu0 0.0
      %335 = vmatprep.mubr.f32.mxu0 0.0
      %336 = vmatmul.mubr.f32.gmra.mrb[0].mxu0 %v263
      %v337 = vpop.f32.mrb[0].mxu0
      %v338 = vadd.f32 0.0, %v337
      %v339 = vpop.f32.mrb[0].mxu0
      %340 = vmatprep.mubr.f32.mxu0 0.0
      %341 = vmatmul.mubr.f32.gmra.mrb[0].mxu0 %v266
      %v342 = vpop.f32.mrb[0].mxu0
      %v343 = vadd.f32 0.0, %v342
      %v344 = vpop.f32.mrb[0].mxu0
      %345 = vmatprep.mubr.f32.mxu0 0.0
      %346 = vmatmul.mubr.f32.gmra.mrb[0].mxu0 %v269
      %v347 = vpop.f32.mrb[0].mxu0
      %v348 = vadd.f32 0.0, %v347
      %v349 = vpop.f32.mrb[0].mxu0
      %350 = vdwg.mxu0
      %v352 = vsel %vm261, %v250, 0
      %v355 = vsel %vm261, %v251, 0
      %v358 = vsel %vm261, %v252, 0
      %360 = vmatprep.subr.mxu0 0.0
      %361 = vmatpush1.msra.mxu0 %v253
      %362 = vmatprep.subr.mxu0 0.0
      %363 = vmatpush1.msra.mxu0 0.0
      %364 = vmatprep.subr.mxu0 0.0
      %365 = vmatpush1.msra.mxu0 0.0
      %366 = vmatprep.subr.mxu0 0.0
      %367 = vmatpush1.msra.mxu0 0.0
      %368 = vmatprep.subr.mxu0 0.0
      %369 = vmatpush1.msra.mxu0 0.0
      %370 = vmatprep.subr.mxu0 0.0
      %371 = vmatpush1.msra.mxu0 0.0
      %372 = vmatprep.subr.mxu0 0.0
      %373 = vmatpush1.msra.mxu0 0.0
      %374 = vmatprep.subr.mxu0 0.0
      %375 = vmatpush1.msra.mxu0 0.0
      %376 = vmatprep.subr.mxu0 0.0
      %377 = vmatpush1.msra.mxu0 0.0
      %378 = vmatprep.subr.mxu0 0.0
      %379 = vmatpush1.msra.mxu0 0.0
      %380 = vmatprep.subr.mxu0 0.0
      %381 = vmatpush1.msra.mxu0 0.0
      %382 = vmatprep.subr.mxu0 0.0
      %383 = vmatpush1.msra.mxu0 0.0
      %384 = vmatprep.subr.mxu0 0.0
      %385 = vmatpush1.msra.mxu0 0.0
      %386 = vmatprep.subr.mxu0 0.0
      %387 = vmatpush1.msra.mxu0 0.0
      %388 = vmatprep.subr.mxu0 0.0
      %389 = vmatpush1.msra.mxu0 0.0
      %390 = vmatprep.subr.mxu0 0.0
      %391 = vmatpush1.msra.mxu0 0.0
      %392 = vmatprep.subr.mxu0 0.0
      %393 = vmatpush1.msra.mxu0 0.0
      %394 = vmatprep.subr.mxu0 0.0
      %395 = vmatpush1.msra.mxu0 0.0
      %396 = vmatprep.subr.mxu0 0.0
      %397 = vmatpush1.msra.mxu0 0.0
      %398 = vmatprep.subr.mxu0 0.0
      %399 = vmatpush1.msra.mxu0 0.0
      %400 = vmatprep.subr.mxu0 0.0
      %401 = vmatpush1.msra.mxu0 0.0
      %402 = vmatprep.subr.mxu0 0.0
      %403 = vmatpush1.msra.mxu0 0.0
      %404 = vmatprep.subr.mxu0 0.0
      %405 = vmatpush1.msra.mxu0 0.0
      %406 = vmatprep.subr.mxu0 0.0
      %407 = vmatpush1.msra.mxu0 0.0
      %408 = vmatprep.subr.mxu0 0.0
      %409 = vmatpush1.msra.mxu0 0.0
      %410 = vmatprep.subr.mxu0 0.0
      %411 = vmatpush1.msra.mxu0 0.0
      %412 = vmatprep.subr.mxu0 0.0
      %413 = vmatpush1.msra.mxu0 0.0
      %414 = vmatprep.subr.mxu0 0.0
      %415 = vmatpush1.msra.mxu0 0.0
      %416 = vmatprep.subr.mxu0 0.0
      %417 = vmatpush1.msra.mxu0 0.0
      %418 = vmatprep.subr.mxu0 0.0
      %419 = vmatpush1.msra.mxu0 0.0
      %420 = vmatprep.subr.mxu0 0.0
      %421 = vmatpush1.msra.mxu0 0.0
      %422 = vmatprep.subr.mxu0 0.0
      %423 = vmatpush1.msra.mxu0 0.0
      %424 = vmatprep.mubr.f32.mxu0 0.0
      %425 = vmatmul.mubr.f32.gmra.mrb[0].mxu0 %v352
      %v426 = vpop.f32.mrb[0].mxu0
      %v427 = vadd.f32 %v338, %v426
      %v428 = vpop.f32.mrb[0].mxu0
      %429 = vmatprep.mubr.f32.mxu0 0.0
      %430 = vmatmul.mubr.f32.gmra.mrb[0].mxu0 %v355
      %v431 = vpop.f32.mrb[0].mxu0
      %v432 = vadd.f32 %v343, %v431
      %v433 = vpop.f32.mrb[0].mxu0
      %434 = vmatprep.mubr.f32.mxu0 0.0
      %435 = vmatmul.mubr.f32.gmra.mrb[0].mxu0 %v358
      %v436 = vpop.f32.mrb[0].mxu0
      %v437 = vadd.f32 %v348, %v436
      %v438 = vpop.f32.mrb[0].mxu0
      %439 = vdwg.mxu0
      %s440 = sadd.s32 %s248, 2
      %s441 = scalar_lea.vmem %s237, %s440
      %v442 = vld [vmem:[%s441] sm:$0xff]
      %v443 = vld [vmem:[%s441 + $0x8] sm:$0xff]
      %v444 = vld [vmem:[%s441 + $0x10] sm:$0x3]
      %s445 = scalar_lea.vmem %s1, 16
      %v446 = vld [vmem:[%s445] sm:$0xff]
      %v448 = vsel %vm261, %v442, 0
      %v451 = vsel %vm261, %v443, 0
      %v454 = vsel %vm261, %v444, 0
      %456 = vmatprep.subr.mxu0 0.0
      %457 = vmatpush1.msra.mxu0 %v446
      %458 = vmatprep.subr.mxu0 0.0
      %459 = vmatpush1.msra.mxu0 0.0
      %460 = vmatprep.subr.mxu0 0.0
      %461 = vmatpush1.msra.mxu0 0.0
      %462 = vmatprep.subr.mxu0 0.0
      %463 = vmatpush1.msra.mxu0 0.0
      %464 = vmatprep.subr.mxu0 0.0
      %465 = vmatpush1.msra.mxu0 0.0
      %466 = vmatprep.subr.mxu0 0.0
      %467 = vmatpush1.msra.mxu0 0.0
      %468 = vmatprep.subr.mxu0 0.0
      %469 = vmatpush1.msra.mxu0 0.0
      %470 = vmatprep.subr.mxu0 0.0
      %471 = vmatpush1.msra.mxu0 0.0
      %472 = vmatprep.subr.mxu0 0.0
      %473 = vmatpush1.msra.mxu0 0.0
      %474 = vmatprep.subr.mxu0 0.0
      %475 = vmatpush1.msra.mxu0 0.0
      %476 = vmatprep.subr.mxu0 0.0
      %477 = vmatpush1.msra.mxu0 0.0
      %478 = vmatprep.subr.mxu0 0.0
      %479 = vmatpush1.msra.mxu0 0.0
      %480 = vmatprep.subr.mxu0 0.0
      %481 = vmatpush1.msra.mxu0 0.0
      %482 = vmatprep.subr.mxu0 0.0
      %483 = vmatpush1.msra.mxu0 0.0
      %484 = vmatprep.subr.mxu0 0.0
      %485 = vmatpush1.msra.mxu0 0.0
      %486 = vmatprep.subr.mxu0 0.0
      %487 = vmatpush1.msra.mxu0 0.0
      %488 = vmatprep.subr.mxu0 0.0
      %489 = vmatpush1.msra.mxu0 0.0
      %490 = vmatprep.subr.mxu0 0.0
      %491 = vmatpush1.msra.mxu0 0.0
      %492 = vmatprep.subr.mxu0 0.0
      %493 = vmatpush1.msra.mxu0 0.0
      %494 = vmatprep.subr.mxu0 0.0
      %495 = vmatpush1.msra.mxu0 0.0
      %496 = vmatprep.subr.mxu0 0.0
      %497 = vmatpush1.msra.mxu0 0.0
      %498 = vmatprep.subr.mxu0 0.0
      %499 = vmatpush1.msra.mxu0 0.0
      %500 = vmatprep.subr.mxu0 0.0
      %501 = vmatpush1.msra.mxu0 0.0
      %502 = vmatprep.subr.mxu0 0.0
      %503 = vmatpush1.msra.mxu0 0.0
      %504 = vmatprep.subr.mxu0 0.0
      %505 = vmatpush1.msra.mxu0 0.0
      %506 = vmatprep.subr.mxu0 0.0
      %507 = vmatpush1.msra.mxu0 0.0
      %508 = vmatprep.subr.mxu0 0.0
      %509 = vmatpush1.msra.mxu0 0.0
      %510 = vmatprep.subr.mxu0 0.0
      %511 = vmatpush1.msra.mxu0 0.0
      %512 = vmatprep.subr.mxu0 0.0
      %513 = vmatpush1.msra.mxu0 0.0
      %514 = vmatprep.subr.mxu0 0.0
      %515 = vmatpush1.msra.mxu0 0.0
      %516 = vmatprep.subr.mxu0 0.0
      %517 = vmatpush1.msra.mxu0 0.0
      %518 = vmatprep.subr.mxu0 0.0
      %519 = vmatpush1.msra.mxu0 0.0
      %520 = vmatprep.mubr.f32.mxu0 0.0
      %521 = vmatmul.mubr.f32.gmra.mrb[0].mxu0 %v448
      %v522 = vpop.f32.mrb[0].mxu0
      %v523 = vadd.f32 0.0, %v522
      %v524 = vpop.f32.mrb[0].mxu0
      %525 = vmatprep.mubr.f32.mxu0 0.0
      %526 = vmatmul.mubr.f32.gmra.mrb[0].mxu0 %v451
      %v527 = vpop.f32.mrb[0].mxu0
      %v528 = vadd.f32 0.0, %v527
      %v529 = vpop.f32.mrb[0].mxu0
      %530 = vmatprep.mubr.f32.mxu0 0.0
      %531 = vmatmul.mubr.f32.gmra.mrb[0].mxu0 %v454
      %v532 = vpop.f32.mrb[0].mxu0
      %v533 = vadd.f32 0.0, %v532
      %v534 = vpop.f32.mrb[0].mxu0
      %535 = vdwg.mxu0
      %v536 = vadd.f32 %v427, %v523
      %v537 = vadd.f32 %v432, %v528
      %v538 = vadd.f32 %v437, %v533
      %v539 = vld [vmem:[%s2] sm:$0x1]
      %v541 = vlaneseq
      %v542 = vshrl.u32 %v541, 7
      %v543 = vsub.s32 0, %v542
      %v544 = vrot.slane %v539, %v543
      %v546 = vadd.f32 %v536, %v544
      %v547 = vadd.f32 %v537, %v544
      %v548 = vadd.f32 %v538, %v544
      %v549 = vmax.f32 %v546, 0.0
      %v550 = vmax.f32 %v547, 0.0
      %v551 = vmax.f32 %v548, 0.0
      %vm552 = vcmask 261120
      %553 = vst.msk [vmem:[#allocation2] sm:$0xff] %vm552, %v549
      %554 = vst.msk [vmem:[#allocation2 + $0x8] sm:$0xff] %vm552, %v550
      %vm555 = vcmask 254976
      %556 = vst.msk [vmem:[#allocation2 + $0x10] sm:$0x3] %vm555, %v551
      %p557 = scmp.lt.s32.totalorder %s248, 1
      %s558 = sadd.s32 %s248, 17
      %p559 = scmp.gt.s32.totalorder %s558, 16
      %p560 = por %p557, %p559
      // Predicated region
      $region41: #{tpu_custom_call.1} parent=39 // pred_check
        %p561 = pneg %p560
      $region42: #{tpu_custom_call.1} parent=39 // pred_check_branch
        %563 = sbr.rel (%p561) target = $region44
      $region43: #{tpu_custom_call.1} parent=39 // pred_region
        %s564 = ssub.s32 %s248, 1
        %v565 = vlaneseq
        %v566 = vshrl.u32 %v565, 7
        %v567 = vadd.s32 %v566, 8
        %v568 = vadd.s32 %v566, 16
        %v569 = vstv %s564
        %v570 = vadd.s32 %v569, %v566
        %v571 = vadd.s32 %v569, %v567
        %v572 = vadd.s32 %v569, %v568
        %vm573 = vcmp.ge.s32.totalorder %v570, 0
        %vm574 = vcmp.ge.s32.totalorder %v571, 0
        %vm575 = vcmp.ge.s32.totalorder %v572, 0
        %vm576 = vcmp.lt.s32.totalorder %v570, 16
        %vm577 = vcmp.lt.s32.totalorder %v571, 16
        %vm578 = vcmp.lt.s32.totalorder %v572, 16
        %vm579 = vmand %vm573, %vm576
        %vm580 = vmand %vm574, %vm577
        %vm581 = vmand %vm575, %vm578
        %v582 = vld [vmem:[#allocation2] sm:$0xff]
        %v583 = vld [vmem:[#allocation2 + $0x8] sm:$0xff]
        %v584 = vld [vmem:[#allocation2 + $0x10] sm:$0x3]
        %v585 = vsel %vm579, 1, 0
        %v586 = vsel %vm580, 1, 0
        %v587 = vsel %vm581, 1, 0
        %vm588 = vcmp.eq.s32.totalorder %v585, 1
        %vm589 = vcmp.eq.s32.totalorder %v586, 1
        %vm590 = vcmp.eq.s32.totalorder %v587, 1
        %v591 = vsel %vm588, %v582, 0.0
        %v592 = vsel %vm589, %v583, 0.0
        %v593 = vsel %vm590, %v584, 0.0
        %594 = vst.msk [vmem:[#allocation2] sm:$0xff] %vm552, %v591
        %595 = vst.msk [vmem:[#allocation2 + $0x8] sm:$0xff] %vm552, %v592
        %596 = vst.msk [vmem:[#allocation2 + $0x10] sm:$0x3] %vm555, %v593
      $region44: #{tpu_custom_call.1} parent=39 // pred_fallthru
        _
      %v597 = vld [vmem:[#allocation2] sm:$0xff]
      %v598 = vld [vmem:[#allocation2 + $0x8] sm:$0xff]
      %v599 = vld [vmem:[%s3] sm:$0xff]
      %v600 = vld [vmem:[%s3 + $0x8] sm:$0xff]
      %v601 = vld [vmem:[%s3 + $0x10] sm:$0xff]
      %v602 = vld [vmem:[%s3 + $0x18] sm:$0xff]
      %v603 = vld [vmem:[#allocation2 + $0x1] sm:$0xff]
      %v604 = vld [vmem:[#allocation2 + $0x9] sm:$0xff]
      %s605 = scalar_lea.vmem %s3, 32
      %v606 = vld [vmem:[%s605] sm:$0xff]
      %v607 = vld [vmem:[%s605 + $0x8] sm:$0xff]
      %v608 = vld [vmem:[%s605 + $0x10] sm:$0xff]
      %v609 = vld [vmem:[%s605 + $0x18] sm:$0xff]
      %v611 = vsel %vm552, %v603, 0
      %v614 = vsel %vm552, %v604, 0
      %616 = vmatprep.subr.mxu0 0.0
      %617 = vmatpush1.msra.mxu0 %v606
      %618 = vmatprep.subr.mxu0 0.0
      %619 = vmatpush1.msra.mxu0 %v607
      %620 = vmatprep.subr.mxu0 0.0
      %621 = vmatpush1.msra.mxu0 %v608
      %622 = vmatprep.subr.mxu0 0.0
      %623 = vmatpush1.msra.mxu0 %v609
      %624 = vmatprep.subr.mxu0 0.0
      %625 = vmatpush1.msra.mxu0 0.0
      %626 = vmatprep.subr.mxu0 0.0
      %627 = vmatpush1.msra.mxu0 0.0
      %628 = vmatprep.subr.mxu0 0.0
      %629 = vmatpush1.msra.mxu0 0.0
      %630 = vmatprep.subr.mxu0 0.0
      %631 = vmatpush1.msra.mxu0 0.0
      %632 = vmatprep.subr.mxu0 0.0
      %633 = vmatpush1.msra.mxu0 0.0
      %634 = vmatprep.subr.mxu0 0.0
      %635 = vmatpush1.msra.mxu0 0.0
      %636 = vmatprep.subr.mxu0 0.0
      %637 = vmatpush1.msra.mxu0 0.0
      %638 = vmatprep.subr.mxu0 0.0
      %639 = vmatpush1.msra.mxu0 0.0
      %640 = vmatprep.subr.mxu0 0.0
      %641 = vmatpush1.msra.mxu0 0.0
      %642 = vmatprep.subr.mxu0 0.0
      %643 = vmatpush1.msra.mxu0 0.0
      %644 = vmatprep.subr.mxu0 0.0
      %645 = vmatpush1.msra.mxu0 0.0
      %646 = vmatprep.subr.mxu0 0.0
      %647 = vmatpush1.msra.mxu0 0.0
      %648 = vmatprep.subr.mxu0 0.0
      %649 = vmatpush1.msra.mxu0 0.0
      %650 = vmatprep.subr.mxu0 0.0
      %651 = vmatpush1.msra.mxu0 0.0
      %652 = vmatprep.subr.mxu0 0.0
      %653 = vmatpush1.msra.mxu0 0.0
      %654 = vmatprep.subr.mxu0 0.0
      %655 = vmatpush1.msra.mxu0 0.0
      %656 = vmatprep.subr.mxu0 0.0
      %657 = vmatpush1.msra.mxu0 0.0
      %658 = vmatprep.subr.mxu0 0.0
      %659 = vmatpush1.msra.mxu0 0.0
      %660 = vmatprep.subr.mxu0 0.0
      %661 = vmatpush1.msra.mxu0 0.0
      %662 = vmatprep.subr.mxu0 0.0
      %663 = vmatpush1.msra.mxu0 0.0
      %664 = vmatprep.subr.mxu0 0.0
      %665 = vmatpush1.msra.mxu0 0.0
      %666 = vmatprep.subr.mxu0 0.0
      %667 = vmatpush1.msra.mxu0 0.0
      %668 = vmatprep.subr.mxu0 0.0
      %669 = vmatpush1.msra.mxu0 0.0
      %670 = vmatprep.subr.mxu0 0.0
      %671 = vmatpush1.msra.mxu0 0.0
      %672 = vmatprep.subr.mxu0 0.0
      %673 = vmatpush1.msra.mxu0 0.0
      %674 = vmatprep.subr.mxu0 0.0
      %675 = vmatpush1.msra.mxu0 0.0
      %676 = vmatprep.subr.mxu0 0.0
      %677 = vmatpush1.msra.mxu0 0.0
      %678 = vmatprep.subr.mxu0 0.0
      %679 = vmatpush1.msra.mxu0 0.0
      %680 = vmatprep.mubr.f32.mxu0 0.0
      %681 = vmatmul.mubr.f32.gmra.mrb[0].mxu0 %v611
      %v682 = vpop.f32.mrb[0].mxu0
      %v683 = vadd.f32 0.0, %v682
      %v684 = vpop.f32.mrb[0].mxu0
      %685 = vmatprep.mubr.f32.mxu0 0.0
      %686 = vmatmul.mubr.f32.gmra.mrb[0].mxu0 %v614
      %v687 = vpop.f32.mrb[0].mxu0
      %v688 = vadd.f32 0.0, %v687
      %v689 = vpop.f32.mrb[0].mxu0
      %690 = vdwg.mxu0
      %v692 = vsel %vm552, %v597, 0
      %v695 = vsel %vm552, %v598, 0
      %697 = vmatprep.subr.mxu0 0.0
      %698 = vmatpush1.msra.mxu0 %v599
      %699 = vmatprep.subr.mxu0 0.0
      %700 = vmatpush1.msra.mxu0 %v600
      %701 = vmatprep.subr.mxu0 0.0
      %702 = vmatpush1.msra.mxu0 %v601
      %703 = vmatprep.subr.mxu0 0.0
      %704 = vmatpush1.msra.mxu0 %v602
      %705 = vmatprep.subr.mxu0 0.0
      %706 = vmatpush1.msra.mxu0 0.0
      %707 = vmatprep.subr.mxu0 0.0
      %708 = vmatpush1.msra.mxu0 0.0
      %709 = vmatprep.subr.mxu0 0.0
      %710 = vmatpush1.msra.mxu0 0.0
      %711 = vmatprep.subr.mxu0 0.0
      %712 = vmatpush1.msra.mxu0 0.0
      %713 = vmatprep.subr.mxu0 0.0
      %714 = vmatpush1.msra.mxu0 0.0
      %715 = vmatprep.subr.mxu0 0.0
      %716 = vmatpush1.msra.mxu0 0.0
      %717 = vmatprep.subr.mxu0 0.0
      %718 = vmatpush1.msra.mxu0 0.0
      %719 = vmatprep.subr.mxu0 0.0
      %720 = vmatpush1.msra.mxu0 0.0
      %721 = vmatprep.subr.mxu0 0.0
      %722 = vmatpush1.msra.mxu0 0.0
      %723 = vmatprep.subr.mxu0 0.0
      %724 = vmatpush1.msra.mxu0 0.0
      %725 = vmatprep.subr.mxu0 0.0
      %726 = vmatpush1.msra.mxu0 0.0
      %727 = vmatprep.subr.mxu0 0.0
      %728 = vmatpush1.msra.mxu0 0.0
      %729 = vmatprep.subr.mxu0 0.0
      %730 = vmatpush1.msra.mxu0 0.0
      %731 = vmatprep.subr.mxu0 0.0
      %732 = vmatpush1.msra.mxu0 0.0
      %733 = vmatprep.subr.mxu0 0.0
      %734 = vmatpush1.msra.mxu0 0.0
      %735 = vmatprep.subr.mxu0 0.0
      %736 = vmatpush1.msra.mxu0 0.0
      %737 = vmatprep.subr.mxu0 0.0
      %738 = vmatpush1.msra.mxu0 0.0
      %739 = vmatprep.subr.mxu0 0.0
      %740 = vmatpush1.msra.mxu0 0.0
      %741 = vmatprep.subr.mxu0 0.0
      %742 = vmatpush1.msra.mxu0 0.0
      %743 = vmatprep.subr.mxu0 0.0
      %744 = vmatpush1.msra.mxu0 0.0
      %745 = vmatprep.subr.mxu0 0.0
      %746 = vmatpush1.msra.mxu0 0.0
      %747 = vmatprep.subr.mxu0 0.0
      %748 = vmatpush1.msra.mxu0 0.0
      %749 = vmatprep.subr.mxu0 0.0
      %750 = vmatpush1.msra.mxu0 0.0
      %751 = vmatprep.subr.mxu0 0.0
      %752 = vmatpush1.msra.mxu0 0.0
      %753 = vmatprep.subr.mxu0 0.0
      %754 = vmatpush1.msra.mxu0 0.0
      %755 = vmatprep.subr.mxu0 0.0
      %756 = vmatpush1.msra.mxu0 0.0
      %757 = vmatprep.subr.mxu0 0.0
      %758 = vmatpush1.msra.mxu0 0.0
      %759 = vmatprep.subr.mxu0 0.0
      %760 = vmatpush1.msra.mxu0 0.0
      %761 = vmatprep.mubr.f32.mxu0 0.0
      %762 = vmatmul.mubr.f32.gmra.mrb[0].mxu0 %v692
      %v763 = vpop.f32.mrb[0].mxu0
      %v764 = vadd.f32 %v683, %v763
      %v765 = vpop.f32.mrb[0].mxu0
      %766 = vmatprep.mubr.f32.mxu0 0.0
      %767 = vmatmul.mubr.f32.gmra.mrb[0].mxu0 %v695
      %v768 = vpop.f32.mrb[0].mxu0
      %v769 = vadd.f32 %v688, %v768
      %v770 = vpop.f32.mrb[0].mxu0
      %771 = vdwg.mxu0
      %v772 = vld [vmem:[#allocation2 + $0x2] sm:$0xff]
      %v773 = vld [vmem:[#allocation2 + $0xa] sm:$0xff]
      %s774 = scalar_lea.vmem %s3, 64
      %v775 = vld [vmem:[%s774] sm:$0xff]
      %v776 = vld [vmem:[%s774 + $0x8] sm:$0xff]
      %v777 = vld [vmem:[%s774 + $0x10] sm:$0xff]
      %v778 = vld [vmem:[%s774 + $0x18] sm:$0xff]
      %v780 = vsel %vm552, %v772, 0
      %v783 = vsel %vm552, %v773, 0
      %785 = vmatprep.subr.mxu0 0.0
      %786 = vmatpush1.msra.mxu0 %v775
      %787 = vmatprep.subr.mxu0 0.0
      %788 = vmatpush1.msra.mxu0 %v776
      %789 = vmatprep.subr.mxu0 0.0
      %790 = vmatpush1.msra.mxu0 %v777
      %791 = vmatprep.subr.mxu0 0.0
      %792 = vmatpush1.msra.mxu0 %v778
      %793 = vmatprep.subr.mxu0 0.0
      %794 = vmatpush1.msra.mxu0 0.0
      %795 = vmatprep.subr.mxu0 0.0
      %796 = vmatpush1.msra.mxu0 0.0
      %797 = vmatprep.subr.mxu0 0.0
      %798 = vmatpush1.msra.mxu0 0.0
      %799 = vmatprep.subr.mxu0 0.0
      %800 = vmatpush1.msra.mxu0 0.0
      %801 = vmatprep.subr.mxu0 0.0
      %802 = vmatpush1.msra.mxu0 0.0
      %803 = vmatprep.subr.mxu0 0.0
      %804 = vmatpush1.msra.mxu0 0.0
      %805 = vmatprep.subr.mxu0 0.0
      %806 = vmatpush1.msra.mxu0 0.0
      %807 = vmatprep.subr.mxu0 0.0
      %808 = vmatpush1.msra.mxu0 0.0
      %809 = vmatprep.subr.mxu0 0.0
      %810 = vmatpush1.msra.mxu0 0.0
      %811 = vmatprep.subr.mxu0 0.0
      %812 = vmatpush1.msra.mxu0 0.0
      %813 = vmatprep.subr.mxu0 0.0
      %814 = vmatpush1.msra.mxu0 0.0
      %815 = vmatprep.subr.mxu0 0.0
      %816 = vmatpush1.msra.mxu0 0.0
      %817 = vmatprep.subr.mxu0 0.0
      %818 = vmatpush1.msra.mxu0 0.0
      %819 = vmatprep.subr.mxu0 0.0
      %820 = vmatpush1.msra.mxu0 0.0
      %821 = vmatprep.subr.mxu0 0.0
      %822 = vmatpush1.msra.mxu0 0.0
      %823 = vmatprep.subr.mxu0 0.0
      %824 = vmatpush1.msra.mxu0 0.0
      %825 = vmatprep.subr.mxu0 0.0
      %826 = vmatpush1.msra.mxu0 0.0
      %827 = vmatprep.subr.mxu0 0.0
      %828 = vmatpush1.msra.mxu0 0.0
      %829 = vmatprep.subr.mxu0 0.0
      %830 = vmatpush1.msra.mxu0 0.0
      %831 = vmatprep.subr.mxu0 0.0
      %832 = vmatpush1.msra.mxu0 0.0
      %833 = vmatprep.subr.mxu0 0.0
      %834 = vmatpush1.msra.mxu0 0.0
      %835 = vmatprep.subr.mxu0 0.0
      %836 = vmatpush1.msra.mxu0 0.0
      %837 = vmatprep.subr.mxu0 0.0
      %838 = vmatpush1.msra.mxu0 0.0
      %839 = vmatprep.subr.mxu0 0.0
      %840 = vmatpush1.msra.mxu0 0.0
      %841 = vmatprep.subr.mxu0 0.0
      %842 = vmatpush1.msra.mxu0 0.0
      %843 = vmatprep.subr.mxu0 0.0
      %844 = vmatpush1.msra.mxu0 0.0
      %845 = vmatprep.subr.mxu0 0.0
      %846 = vmatpush1.msra.mxu0 0.0
      %847 = vmatprep.subr.mxu0 0.0
      %848 = vmatpush1.msra.mxu0 0.0
      %849 = vmatprep.mubr.f32.mxu0 0.0
      %850 = vmatmul.mubr.f32.gmra.mrb[0].mxu0 %v780
      %v851 = vpop.f32.mrb[0].mxu0
      %v852 = vadd.f32 0.0, %v851
      %v853 = vpop.f32.mrb[0].mxu0
      %854 = vmatprep.mubr.f32.mxu0 0.0
      %855 = vmatmul.mubr.f32.gmra.mrb[0].mxu0 %v783
      %v856 = vpop.f32.mrb[0].mxu0
      %v857 = vadd.f32 0.0, %v856
      %v858 = vpop.f32.mrb[0].mxu0
      %859 = vdwg.mxu0
      %v860 = vadd.f32 %v764, %v852
      %v861 = vadd.f32 %v769, %v857
      %v862 = vld [vmem:[%s4] sm:$0x1]
      %v864 = vlaneseq
      %v865 = vshrl.u32 %v864, 7
      %v866 = vsub.s32 0, %v865
      %v867 = vrot.slane %v862, %v866
      %v869 = vadd.f32 %v860, %v867
      %v870 = vadd.f32 %v861, %v867
      %871 = vst.msk [vmem:[%s246] sm:$0xff] %vm261, %v869
      %872 = vst.msk [vmem:[%s246 + $0x8] sm:$0xff] %vm261, %v870
      %s873 = smul.u32 2, %s21
      %p874 = scmp.lt.s32.totalorder %s20, 1
      %s875 = scalar_select %p874, %s20, 1
      %p876 = scmp.lt.s32.totalorder %s873, 1
      %s877 = scalar_select %p876, %s873, 1
      %s878 = smul.addr %s875, 2
      %s879 = sadd.s32 %s877, %s878
      %s880 = smul.addr %s879, 8
      %s881 = scalar_lea.vmem %s5, %s880
      // Predicated region
      $region45: #{tpu_custom_call.1} parent=39 // pred_check
        %p882 = pneg %p158
      $region46: #{tpu_custom_call.1} parent=39 // pred_check_branch
        %884 = sbr.rel (%p882) target = $region48
      $region47: #{tpu_custom_call.1} parent=39 // pred_region
        %s885 = smul.u32 2, %s21
      $region48: #{tpu_custom_call.1} parent=39 // pred_fallthru
        _
    $region40: #{tpu_custom_call.1} parent=5 // pred_fallthru
      _
    %p886 = scmp.le.s32.totalorder 2, %s11
    // Predicated region
    $region49: #{tpu_custom_call.1} parent=5 // pred_check
      %p887 = pneg %p886
    $region50: #{tpu_custom_call.1} parent=5 // pred_check_branch
      %889 = sbr.rel (%p887) target = $region52
    $region51: #{tpu_custom_call.1} parent=5 // pred_region
      %s890 = ssub.s32 %s11, 2
      // Predicated region
      $region53: #{tpu_custom_call.1} parent=51 // pred_check
        %p891 = pneg %p164
      $region54: #{tpu_custom_call.1} parent=51 // pred_check_branch
        %893 = sbr.rel (%p891) target = $region56
      $region55: #{tpu_custom_call.1} parent=51 // pred_region
        %s894 = smul.u32 2, %s23
        %p895 = scmp.lt.s32.totalorder %s22, 1
        %s896 = scalar_select %p895, %s22, 1
        %p897 = scmp.lt.s32.totalorder %s894, 1
        %s898 = scalar_select %p897, %s894, 1
        %s899 = smul.addr %s896, 2
        %s900 = sadd.s32 %s898, %s899
        %s901 = smul.addr %s900, 8
        %s902 = scalar_lea.vmem %s5, %s901
      $region56: #{tpu_custom_call.1} parent=51 // pred_fallthru
        _
    $region52: #{tpu_custom_call.1} parent=5 // pred_fallthru
      _
  $region6: #{tpu_custom_call.1} parent=0 // loop_footer
    %s15 = sadd.s32 1, %s11
  $region7: #{tpu_custom_call.1} parent=0 // loop_footer_branch
    %10 = sbr.rel target = $region3
  $region8: #{tpu_custom_call.1} parent=0 // loop_exit
    _

</llo_original>
